<compile_context>
chip_gen: v7x
topology: tpu7x:2x2x1
jax: 0.10.0
libtpu: 0.0.40
codegen_flags: <defaults>
</compile_context>

<pallas_src>
import functools

import jax
import jax.numpy as jnp
from jax import lax
from jax.experimental import pallas as pl
from jax.experimental.pallas import tpu as pltpu


# -----------------------------------------------------------------------------
# Fused kernel: conv3x3 SAME (in-kernel im2col) + bias + ReLU + masked GAP + FC.
#
#   x_ref   : (1, Cin, (H+2)*(W+2))  bf16  halo-padded flat image (one image)
#   w_ref   : (9, Cout, Cin)         bf16  conv weights, tap-major (kh, kw)
#   cb_ref  : (Cout, 1)              f32   conv bias
#   fcw_ref : (Cout, D)              f32   FC weight
#   fcb_ref : (1, D)                 f32   FC bias
#   gap_ref : (1, L)                 f32   1/(H*W) at valid columns, 0 at pad cols
#   o_ref   : (1, 1, D)              f32   embedding (lane-dense)
#
# grid = (B,), one image per step, batch axis "parallel".
# -----------------------------------------------------------------------------
def _fused_backbone_kernel(x_ref, w_ref, cb_ref, fcw_ref, fcb_ref, gap_ref,
                           o_ref, *, H, W, Wp):
    # Flat "base" index space: p = i*Wp + j for output pixel (i, j).
    L = (H - 1) * Wp + W

    # In-kernel im2col: tap (kh, kw) of the padded image is the static slice
    # starting at kh*Wp + kw.  Accumulate 9 (Cout,Cin)x(Cin,L) MXU matmuls.
    s = None
    for t in range(9):                       # static unroll over the 9 taps
        kh, kw = divmod(t, 3)
        off = kh * Wp + kw
        xs = x_ref[0, :, off:off + L]        # (Cin, L) bf16, static slice
        part = jnp.dot(w_ref[t], xs, preferred_element_type=jnp.float32)
        s = part if s is None else s + part  # (Cout, L) f32 accumulation

    s = jnp.maximum(s + cb_ref[...], 0.0)    # bias + ReLU (f32, VPU)

    # Masked global-average-pool folded into one MXU pass:
    # pooled[0, c] = sum_p gap[p] * s[c, p]   (gap = 1/(H*W) on valid cols).
    pooled = lax.dot_general(gap_ref[...], s, (((1,), (1,)), ((), ())),
                             preferred_element_type=jnp.float32)   # (1, Cout)

    emb = jnp.dot(pooled, fcw_ref[...],
                  preferred_element_type=jnp.float32)              # (1, D)
    o_ref[0] = emb + fcb_ref[...]                                  # lane-dense


def fused_backbone_pallas(x_flat, w_taps, conv_b_col, fc_w, fc_b_row, gap_vec,
                          *, H, W):
    B, Cin, HpWp = x_flat.shape
    Wp = W + 2
    Cout = w_taps.shape[1]
    D = fc_w.shape[1]
    L = gap_vec.shape[1]

    kernel = functools.partial(_fused_backbone_kernel, H=H, W=W, Wp=Wp)
    out = pl.pallas_call(
        kernel,
        out_shape=jax.ShapeDtypeStruct((B, 1, D), jnp.float32),
        grid_spec=pltpu.PrefetchScalarGridSpec(
            num_scalar_prefetch=0,
            grid=(B,),
            in_specs=[
                pl.BlockSpec((1, Cin, HpWp), lambda b: (b, 0, 0)),
                pl.BlockSpec((9, Cout, Cin), lambda b: (0, 0, 0)),
                pl.BlockSpec((Cout, 1), lambda b: (0, 0)),
                pl.BlockSpec((Cout, D), lambda b: (0, 0)),
                pl.BlockSpec((1, D), lambda b: (0, 0)),
                pl.BlockSpec((1, L), lambda b: (0, 0)),
            ],
            out_specs=pl.BlockSpec((1, 1, D), lambda b: (b, 0, 0)),
        ),
        compiler_params=pltpu.CompilerParams(
            dimension_semantics=("parallel",),
        ),
    )(x_flat, w_taps, conv_b_col, fc_w, fc_b_row, gap_vec)
    return out.reshape(B, D)


# -----------------------------------------------------------------------------
# Wrapper glue: bf16 cast + 1-pixel halo pad + flatten (pure layout plumbing;
# no im2col materialization, no NHWC transpose).
# -----------------------------------------------------------------------------
def backbone_forward(params, x_nchw):
    """Synthetic InsightFace-style backbone: conv3x3 -> ReLU -> GAP -> FC."""
    B, Cin, H, W = x_nchw.shape
    Hp, Wp = H + 2, W + 2

    conv_w, conv_b = params["conv_w"], params["conv_b"]
    fc_w, fc_b = params["fc_w"], params["fc_b"]
    Cout = conv_w.shape[0]
    D = fc_w.shape[1]

    # bf16 BEFORE padding (halves the plumbing bytes); pad the SAME-conv halo.
    x_pad = jnp.pad(x_nchw.astype(jnp.bfloat16),
                    ((0, 0), (0, 0), (1, 1), (1, 1)))
    x_flat = x_pad.reshape(B, Cin, Hp * Wp)

    # (Cout, Cin, 3, 3) -> (kh, kw, Cout, Cin) -> (9, Cout, Cin), tap-major.
    w_taps = jnp.transpose(conv_w, (2, 3, 0, 1)).reshape(9, Cout, Cin)
    w_taps = w_taps.astype(jnp.bfloat16)

    cb = conv_b.reshape(Cout, 1).astype(jnp.float32)
    fcw = fc_w.astype(jnp.float32)                 # (Cout, D)
    fcb = fc_b.reshape(1, D).astype(jnp.float32)

    # GAP row vector over the flat base index space p = i*Wp + j:
    # 1/(H*W) where the column is a real pixel (j < W), 0 on halo columns.
    L = (H - 1) * Wp + W
    col = jnp.arange(L) % Wp
    gap_vec = jnp.where(col < W, 1.0 / float(H * W), 0.0)
    gap_vec = gap_vec.astype(jnp.float32).reshape(1, L)

    return fused_backbone_pallas(x_flat, w_taps, cb, fcw, fcb, gap_vec,
                                 H=H, W=W)


def kinship_forward(params, x1, x2):
    """Mirrors KinshipVerificationModel.forward: shared backbone, two branches.

    Both branches are concatenated along batch so a single fused kernel call
    processes them; the batch grid axis is "parallel" (megacore on v7x).
    """
    B = x1.shape[0]
    x = jnp.concatenate([x1, x2], axis=0)
    emb = backbone_forward(params, x)
    return emb[:B], emb[B:]


# -----------------------------------------------------------------------------
# Pure-JAX reference (numerics matched: conv inputs/weights rounded to bf16 like
# the kernel's MXU operands, everything else f32).
# -----------------------------------------------------------------------------
def backbone_reference(params, x_nchw):
    conv_w = params["conv_w"].astype(jnp.bfloat16).astype(jnp.float32)
    x = x_nchw.astype(jnp.bfloat16).astype(jnp.float32)
    y = lax.conv_general_dilated(
        x, conv_w, (1, 1), "SAME",
        dimension_numbers=("NCHW", "OIHW", "NCHW"),
        precision=lax.Precision.HIGHEST)
    y = jnp.maximum(y + params["conv_b"][None, :, None, None], 0.0)
    pooled = jnp.mean(y, axis=(2, 3))
    return (jnp.dot(pooled, params["fc_w"], precision=lax.Precision.HIGHEST)
            + params["fc_b"])


# -----------------------------------------------------------------------------
# Deterministic parameter init (synthetic; the ONNX checkpoint cannot be read).
# -----------------------------------------------------------------------------
def init_params(key, cin=3, cout=16, emb_dim=64):
    k1, k2, k3, k4 = jax.random.split(key, 4)
    conv_scale = 1.0 / jnp.sqrt(cin * 9.0)
    fc_scale = 1.0 / jnp.sqrt(float(cout))
    return {
        "conv_w": jax.random.normal(k1, (cout, cin, 3, 3), jnp.float32) * conv_scale,
        "conv_b": jax.random.normal(k2, (cout,), jnp.float32) * 0.01,
        "fc_w": jax.random.normal(k3, (cout, emb_dim), jnp.float32) * fc_scale,
        "fc_b": jax.random.normal(k4, (emb_dim,), jnp.float32) * 0.01,
    }


if __name__ == "__main__":
    key = jax.random.PRNGKey(0)
    kp, kx1, kx2 = jax.random.split(key, 3)

    B, C, H, W = 2, 3, 16, 16          # small stand-in for (B, 3, 112, 112)
    params = init_params(kp, cin=C, cout=16, emb_dim=64)
    x1 = jax.random.normal(kx1, (B, C, H, W), jnp.float32)
    x2 = jax.random.normal(kx2, (B, C, H, W), jnp.float32)

    fwd = jax.jit(functools.partial(kinship_forward, params))
    emb1, emb2 = fwd(x1, x2)
    emb1 = jax.block_until_ready(emb1)
    emb2 = jax.block_until_ready(emb2)

    # Correctness check against a plain-JAX reference of the same backbone.
    ref1 = backbone_reference(params, x1)
    ref2 = backbone_reference(params, x2)
    assert emb1.shape == (B, 64) and emb2.shape == (B, 64)
    assert jnp.allclose(emb1, ref1, rtol=1e-3, atol=1e-3)
    assert jnp.allclose(emb2, ref2, rtol=1e-3, atol=1e-3)

    print("KERNEL_OK")
</pallas_src>

<mosaic_0001>
module attributes {stable_mosaic.version = 11 : i64} {
  func.func @_fused_backbone_kernel(%arg0: i32, %arg1: memref<1x3x324xbf16, #tpu.memory_space<vmem>>, %arg2: memref<9x16x3xbf16, #tpu.memory_space<vmem>>, %arg3: memref<16x1xf32, #tpu.memory_space<vmem>>, %arg4: memref<16x64xf32, #tpu.memory_space<vmem>>, %arg5: memref<1x64xf32, #tpu.memory_space<vmem>>, %arg6: memref<1x286xf32, #tpu.memory_space<vmem>>, %arg7: memref<1x1x64xf32, #tpu.memory_space<vmem>>) attributes {dimension_semantics = [#tpu.dimension_semantics<parallel>], iteration_bounds = array<i64: 4>, scalar_prefetch = 0 : i64, scratch_operands = 0 : i64, tpu.core_type = #tpu.core_type<tc>, window_params = [{transform_indices = @transform_0, window_bounds = array<i64: 1, 3, 324>}, {pipeline_mode = #tpu.pipeline_mode<synchronous>, transform_indices = @transform_1, window_bounds = array<i64: 9, 16, 3>}, {pipeline_mode = #tpu.pipeline_mode<synchronous>, transform_indices = @transform_2, window_bounds = array<i64: 16, 1>}, {pipeline_mode = #tpu.pipeline_mode<synchronous>, transform_indices = @transform_3, window_bounds = array<i64: 16, 64>}, {pipeline_mode = #tpu.pipeline_mode<synchronous>, transform_indices = @transform_4, window_bounds = array<i64: 1, 64>}, {pipeline_mode = #tpu.pipeline_mode<synchronous>, transform_indices = @transform_5, window_bounds = array<i64: 1, 286>}, {transform_indices = @transform_6, window_bounds = array<i64: 1, 1, 64>}]} {
    %c0 = arith.constant 0 : index
    %c0_0 = arith.constant 0 : index
    %c0_1 = arith.constant 0 : index
    %0 = vector.load %arg1[%c0, %c0_0, %c0_1] : memref<1x3x324xbf16, #tpu.memory_space<vmem>>, vector<1x3x286xbf16>
    %1 = vector.shape_cast %0 : vector<1x3x286xbf16> to vector<3x286xbf16>
    %c0_2 = arith.constant 0 : index
    %c0_3 = arith.constant 0 : index
    %c0_4 = arith.constant 0 : index
    %2 = vector.load %arg2[%c0_2, %c0_3, %c0_4] : memref<9x16x3xbf16, #tpu.memory_space<vmem>>, vector<1x16x3xbf16>
    %3 = vector.shape_cast %2 : vector<1x16x3xbf16> to vector<16x3xbf16>
    %cst = arith.constant dense<0.000000e+00> : vector<16x286xf32>
    %4 = tpu.matmul %3, %1, %cst {dimension_numbers = #tpu.dot_dimension_numbers<[1], [0], [0], [1], [0, 0, 1, 1], [], []>} : vector<16x3xbf16>, vector<3x286xbf16>, vector<16x286xf32> -> vector<16x286xf32>
    %c0_5 = arith.constant 0 : index
    %c0_6 = arith.constant 0 : index
    %c1 = arith.constant 1 : index
    %5 = vector.load %arg1[%c0_5, %c0_6, %c1] : memref<1x3x324xbf16, #tpu.memory_space<vmem>>, vector<1x3x286xbf16>
    %6 = vector.shape_cast %5 : vector<1x3x286xbf16> to vector<3x286xbf16>
    %c1_7 = arith.constant 1 : index
    %c0_8 = arith.constant 0 : index
    %c0_9 = arith.constant 0 : index
    %7 = vector.load %arg2[%c1_7, %c0_8, %c0_9] : memref<9x16x3xbf16, #tpu.memory_space<vmem>>, vector<1x16x3xbf16>
    %8 = vector.shape_cast %7 : vector<1x16x3xbf16> to vector<16x3xbf16>
    %cst_10 = arith.constant dense<0.000000e+00> : vector<16x286xf32>
    %9 = tpu.matmul %8, %6, %cst_10 {dimension_numbers = #tpu.dot_dimension_numbers<[1], [0], [0], [1], [0, 0, 1, 1], [], []>} : vector<16x3xbf16>, vector<3x286xbf16>, vector<16x286xf32> -> vector<16x286xf32>
    %10 = arith.addf %4, %9 : vector<16x286xf32>
    %c0_11 = arith.constant 0 : index
    %c0_12 = arith.constant 0 : index
    %c2 = arith.constant 2 : index
    %11 = vector.load %arg1[%c0_11, %c0_12, %c2] : memref<1x3x324xbf16, #tpu.memory_space<vmem>>, vector<1x3x286xbf16>
    %12 = vector.shape_cast %11 : vector<1x3x286xbf16> to vector<3x286xbf16>
    %c2_13 = arith.constant 2 : index
    %c0_14 = arith.constant 0 : index
    %c0_15 = arith.constant 0 : index
    %13 = vector.load %arg2[%c2_13, %c0_14, %c0_15] : memref<9x16x3xbf16, #tpu.memory_space<vmem>>, vector<1x16x3xbf16>
    %14 = vector.shape_cast %13 : vector<1x16x3xbf16> to vector<16x3xbf16>
    %cst_16 = arith.constant dense<0.000000e+00> : vector<16x286xf32>
    %15 = tpu.matmul %14, %12, %cst_16 {dimension_numbers = #tpu.dot_dimension_numbers<[1], [0], [0], [1], [0, 0, 1, 1], [], []>} : vector<16x3xbf16>, vector<3x286xbf16>, vector<16x286xf32> -> vector<16x286xf32>
    %16 = arith.addf %10, %15 : vector<16x286xf32>
    %c0_17 = arith.constant 0 : index
    %c0_18 = arith.constant 0 : index
    %c18 = arith.constant 18 : index
    %17 = vector.load %arg1[%c0_17, %c0_18, %c18] : memref<1x3x324xbf16, #tpu.memory_space<vmem>>, vector<1x3x286xbf16>
    %18 = vector.shape_cast %17 : vector<1x3x286xbf16> to vector<3x286xbf16>
    %c3 = arith.constant 3 : index
    %c0_19 = arith.constant 0 : index
    %c0_20 = arith.constant 0 : index
    %19 = vector.load %arg2[%c3, %c0_19, %c0_20] : memref<9x16x3xbf16, #tpu.memory_space<vmem>>, vector<1x16x3xbf16>
    %20 = vector.shape_cast %19 : vector<1x16x3xbf16> to vector<16x3xbf16>
    %cst_21 = arith.constant dense<0.000000e+00> : vector<16x286xf32>
    %21 = tpu.matmul %20, %18, %cst_21 {dimension_numbers = #tpu.dot_dimension_numbers<[1], [0], [0], [1], [0, 0, 1, 1], [], []>} : vector<16x3xbf16>, vector<3x286xbf16>, vector<16x286xf32> -> vector<16x286xf32>
    %22 = arith.addf %16, %21 : vector<16x286xf32>
    %c0_22 = arith.constant 0 : index
    %c0_23 = arith.constant 0 : index
    %c19 = arith.constant 19 : index
    %23 = vector.load %arg1[%c0_22, %c0_23, %c19] : memref<1x3x324xbf16, #tpu.memory_space<vmem>>, vector<1x3x286xbf16>
    %24 = vector.shape_cast %23 : vector<1x3x286xbf16> to vector<3x286xbf16>
    %c4 = arith.constant 4 : index
    %c0_24 = arith.constant 0 : index
    %c0_25 = arith.constant 0 : index
    %25 = vector.load %arg2[%c4, %c0_24, %c0_25] : memref<9x16x3xbf16, #tpu.memory_space<vmem>>, vector<1x16x3xbf16>
    %26 = vector.shape_cast %25 : vector<1x16x3xbf16> to vector<16x3xbf16>
    %cst_26 = arith.constant dense<0.000000e+00> : vector<16x286xf32>
    %27 = tpu.matmul %26, %24, %cst_26 {dimension_numbers = #tpu.dot_dimension_numbers<[1], [0], [0], [1], [0, 0, 1, 1], [], []>} : vector<16x3xbf16>, vector<3x286xbf16>, vector<16x286xf32> -> vector<16x286xf32>
    %28 = arith.addf %22, %27 : vector<16x286xf32>
    %c0_27 = arith.constant 0 : index
    %c0_28 = arith.constant 0 : index
    %c20 = arith.constant 20 : index
    %29 = vector.load %arg1[%c0_27, %c0_28, %c20] : memref<1x3x324xbf16, #tpu.memory_space<vmem>>, vector<1x3x286xbf16>
    %30 = vector.shape_cast %29 : vector<1x3x286xbf16> to vector<3x286xbf16>
    %c5 = arith.constant 5 : index
    %c0_29 = arith.constant 0 : index
    %c0_30 = arith.constant 0 : index
    %31 = vector.load %arg2[%c5, %c0_29, %c0_30] : memref<9x16x3xbf16, #tpu.memory_space<vmem>>, vector<1x16x3xbf16>
    %32 = vector.shape_cast %31 : vector<1x16x3xbf16> to vector<16x3xbf16>
    %cst_31 = arith.constant dense<0.000000e+00> : vector<16x286xf32>
    %33 = tpu.matmul %32, %30, %cst_31 {dimension_numbers = #tpu.dot_dimension_numbers<[1], [0], [0], [1], [0, 0, 1, 1], [], []>} : vector<16x3xbf16>, vector<3x286xbf16>, vector<16x286xf32> -> vector<16x286xf32>
    %34 = arith.addf %28, %33 : vector<16x286xf32>
    %c0_32 = arith.constant 0 : index
    %c0_33 = arith.constant 0 : index
    %c36 = arith.constant 36 : index
    %35 = vector.load %arg1[%c0_32, %c0_33, %c36] : memref<1x3x324xbf16, #tpu.memory_space<vmem>>, vector<1x3x286xbf16>
    %36 = vector.shape_cast %35 : vector<1x3x286xbf16> to vector<3x286xbf16>
    %c6 = arith.constant 6 : index
    %c0_34 = arith.constant 0 : index
    %c0_35 = arith.constant 0 : index
    %37 = vector.load %arg2[%c6, %c0_34, %c0_35] : memref<9x16x3xbf16, #tpu.memory_space<vmem>>, vector<1x16x3xbf16>
    %38 = vector.shape_cast %37 : vector<1x16x3xbf16> to vector<16x3xbf16>
    %cst_36 = arith.constant dense<0.000000e+00> : vector<16x286xf32>
    %39 = tpu.matmul %38, %36, %cst_36 {dimension_numbers = #tpu.dot_dimension_numbers<[1], [0], [0], [1], [0, 0, 1, 1], [], []>} : vector<16x3xbf16>, vector<3x286xbf16>, vector<16x286xf32> -> vector<16x286xf32>
    %40 = arith.addf %34, %39 : vector<16x286xf32>
    %c0_37 = arith.constant 0 : index
    %c0_38 = arith.constant 0 : index
    %c37 = arith.constant 37 : index
    %41 = vector.load %arg1[%c0_37, %c0_38, %c37] : memref<1x3x324xbf16, #tpu.memory_space<vmem>>, vector<1x3x286xbf16>
    %42 = vector.shape_cast %41 : vector<1x3x286xbf16> to vector<3x286xbf16>
    %c7 = arith.constant 7 : index
    %c0_39 = arith.constant 0 : index
    %c0_40 = arith.constant 0 : index
    %43 = vector.load %arg2[%c7, %c0_39, %c0_40] : memref<9x16x3xbf16, #tpu.memory_space<vmem>>, vector<1x16x3xbf16>
    %44 = vector.shape_cast %43 : vector<1x16x3xbf16> to vector<16x3xbf16>
    %cst_41 = arith.constant dense<0.000000e+00> : vector<16x286xf32>
    %45 = tpu.matmul %44, %42, %cst_41 {dimension_numbers = #tpu.dot_dimension_numbers<[1], [0], [0], [1], [0, 0, 1, 1], [], []>} : vector<16x3xbf16>, vector<3x286xbf16>, vector<16x286xf32> -> vector<16x286xf32>
    %46 = arith.addf %40, %45 : vector<16x286xf32>
    %c0_42 = arith.constant 0 : index
    %c0_43 = arith.constant 0 : index
    %c38 = arith.constant 38 : index
    %47 = vector.load %arg1[%c0_42, %c0_43, %c38] : memref<1x3x324xbf16, #tpu.memory_space<vmem>>, vector<1x3x286xbf16>
    %48 = vector.shape_cast %47 : vector<1x3x286xbf16> to vector<3x286xbf16>
    %c8 = arith.constant 8 : index
    %c0_44 = arith.constant 0 : index
    %c0_45 = arith.constant 0 : index
    %49 = vector.load %arg2[%c8, %c0_44, %c0_45] : memref<9x16x3xbf16, #tpu.memory_space<vmem>>, vector<1x16x3xbf16>
    %50 = vector.shape_cast %49 : vector<1x16x3xbf16> to vector<16x3xbf16>
    %cst_46 = arith.constant dense<0.000000e+00> : vector<16x286xf32>
    %51 = tpu.matmul %50, %48, %cst_46 {dimension_numbers = #tpu.dot_dimension_numbers<[1], [0], [0], [1], [0, 0, 1, 1], [], []>} : vector<16x3xbf16>, vector<3x286xbf16>, vector<16x286xf32> -> vector<16x286xf32>
    %52 = arith.addf %46, %51 : vector<16x286xf32>
    %c0_47 = arith.constant 0 : index
    %c0_48 = arith.constant 0 : index
    %53 = vector.load %arg3[%c0_47, %c0_48] : memref<16x1xf32, #tpu.memory_space<vmem>>, vector<16x1xf32>
    %54 = vector.broadcast %53 : vector<16x1xf32> to vector<16x286xf32>
    %55 = arith.addf %52, %54 : vector<16x286xf32>
    %cst_49 = arith.constant 0.000000e+00 : f32
    %56 = vector.broadcast %cst_49 : f32 to vector<16x286xf32>
    %57 = arith.maximumf %55, %56 : vector<16x286xf32>
    %c0_50 = arith.constant 0 : index
    %c0_51 = arith.constant 0 : index
    %58 = vector.load %arg6[%c0_50, %c0_51] : memref<1x286xf32, #tpu.memory_space<vmem>>, vector<1x286xf32>
    %cst_52 = arith.constant dense<0.000000e+00> : vector<1x16xf32>
    %59 = tpu.matmul %58, %57, %cst_52 {dimension_numbers = #tpu.dot_dimension_numbers<[1], [1], [0], [0], [0, 0, 1, 0], [], []>} : vector<1x286xf32>, vector<16x286xf32>, vector<1x16xf32> -> vector<1x16xf32>
    %c0_53 = arith.constant 0 : index
    %c0_54 = arith.constant 0 : index
    %60 = vector.load %arg4[%c0_53, %c0_54] : memref<16x64xf32, #tpu.memory_space<vmem>>, vector<16x64xf32>
    %cst_55 = arith.constant dense<0.000000e+00> : vector<1x64xf32>
    %61 = tpu.matmul %59, %60, %cst_55 {dimension_numbers = #tpu.dot_dimension_numbers<[1], [0], [0], [1], [0, 0, 1, 1], [], []>} : vector<1x16xf32>, vector<16x64xf32>, vector<1x64xf32> -> vector<1x64xf32>
    %c0_56 = arith.constant 0 : index
    %c0_57 = arith.constant 0 : index
    %62 = vector.load %arg5[%c0_56, %c0_57] : memref<1x64xf32, #tpu.memory_space<vmem>>, vector<1x64xf32>
    %63 = arith.addf %61, %62 : vector<1x64xf32>
    %c0_58 = arith.constant 0 : index
    %c0_59 = arith.constant 0 : index
    %c0_60 = arith.constant 0 : index
    %64 = vector.load %arg7[%c0_58, %c0_59, %c0_60] : memref<1x1x64xf32, #tpu.memory_space<vmem>>, vector<1x1x64xf32>
    %65 = vector.shape_cast %64 : vector<1x1x64xf32> to vector<1x64xf32>
    %66 = vector.shape_cast %63 : vector<1x64xf32> to vector<1x1x64xf32>
    tpu.vector_store %arg7[%c0_58, %c0_59, %c0_60], %66 {strides = array<i32>} : memref<1x1x64xf32, #tpu.memory_space<vmem>>, vector<1x1x64xf32>,
    return
  }
  func.func @transform_0(%arg0: i32) -> (i32, i32, i32) {
    %c0_i32 = arith.constant 0 : i32
    %c0_i32_0 = arith.constant 0 : i32
    %c0_i32_1 = arith.constant 0 : i32
    return %arg0, %c0_i32, %c0_i32_0 : i32, i32, i32
  }
  func.func @transform_1(%arg0: i32) -> (i32, i32, i32) {
    %c0_i32 = arith.constant 0 : i32
    %c0_i32_0 = arith.constant 0 : i32
    %c0_i32_1 = arith.constant 0 : i32
    %c0_i32_2 = arith.constant 0 : i32
    return %c0_i32, %c0_i32_0, %c0_i32_1 : i32, i32, i32
  }
  func.func @transform_2(%arg0: i32) -> (i32, i32) {
    %c0_i32 = arith.constant 0 : i32
    %c0_i32_0 = arith.constant 0 : i32
    %c0_i32_1 = arith.constant 0 : i32
    return %c0_i32, %c0_i32_0 : i32, i32
  }
  func.func @transform_3(%arg0: i32) -> (i32, i32) {
    %c0_i32 = arith.constant 0 : i32
    %c0_i32_0 = arith.constant 0 : i32
    %c0_i32_1 = arith.constant 0 : i32
    return %c0_i32, %c0_i32_0 : i32, i32
  }
  func.func @transform_4(%arg0: i32) -> (i32, i32) {
    %c0_i32 = arith.constant 0 : i32
    %c0_i32_0 = arith.constant 0 : i32
    %c0_i32_1 = arith.constant 0 : i32
    return %c0_i32, %c0_i32_0 : i32, i32
  }
  func.func @transform_5(%arg0: i32) -> (i32, i32) {
    %c0_i32 = arith.constant 0 : i32
    %c0_i32_0 = arith.constant 0 : i32
    %c0_i32_1 = arith.constant 0 : i32
    return %c0_i32, %c0_i32_0 : i32, i32
  }
  func.func @transform_6(%arg0: i32) -> (i32, i32, i32) {
    %c0_i32 = arith.constant 0 : i32
    %c0_i32_0 = arith.constant 0 : i32
    %c0_i32_1 = arith.constant 0 : i32
    return %arg0, %c0_i32, %c0_i32_0 : i32, i32, i32
  }
}

</mosaic_0001>

<llo_original>
// kernel: kinship_forward.1
$region0: #{kinship_forward.1}
  #allocation0 [shape = 'u32[]', space=smem, size = 0x4, offset = 0x4, fixed_abs, tag = 'smem constant byte address 0x4 - core index']
  #allocation1 [shape = 'u32[144,128]{1,0:T(1,128)}', space=vmem, size = 0x12000, scoped, tag = 'internal scratch']
  %s0 = inlined_call_operand.vmem [shape: bf16[4,3,324], index: 0, kind: input, shape index: {}]
  %s1 = inlined_call_operand.vmem [shape: bf16[9,16,3], index: 1, kind: input, shape index: {}]
  %s2 = inlined_call_operand.vmem [shape: f32[16,1], index: 2, kind: input, shape index: {}]
  %s3 = inlined_call_operand.vmem [shape: f32[16,64], index: 3, kind: input, shape index: {}]
  %s4 = inlined_call_operand.vmem [shape: f32[1,64], index: 4, kind: input, shape index: {}]
  %s5 = inlined_call_operand.vmem [shape: f32[1,286], index: 5, kind: input, shape index: {}]
  %s6 = inlined_call_operand.vmem [shape: f32[4,1,64], index: 6, kind: output, shape index: {}]
  %s7 = sld [smem:[#allocation0]]
  $region57: #{kinship_forward.1} parent=0
    _
  %s9 = ssub.s32 1, %s7
  %s10 = scalar_select 0, %s9, %s7
  loop: start=0, step=1, limit=6
  $region2: #{kinship_forward.1} parent=0 // loop_pre_header
    _
  $region3: #{kinship_forward.1} parent=0 // loop_header
    %s12 = sphi 0, %s16
    %p13 = scmp.ge.s32.totalorder %s12, 6
    %s22 = sphi 0, %s24
    %s25 = sphi 0, %s22
    %s26 = sphi 0, %s25
    %s42 = sphi 0, %s26
    %s46 = sphi 0, %s46
    %s48 = sphi 0, %s46
    %s49 = sphi 0, %s48
    %s63 = sphi 0, %s49
    %s67 = sphi 0, %s67
    %s69 = sphi 0, %s67
    %s70 = sphi 0, %s69
    %s84 = sphi 0, %s70
    %s88 = sphi 0, %s88
    %s90 = sphi 0, %s88
    %s91 = sphi 0, %s90
    %s105 = sphi 0, %s91
    %s109 = sphi 0, %s109
    %s111 = sphi 0, %s109
    %s112 = sphi 0, %s111
    %s126 = sphi 0, %s112
    %s130 = sphi 0, %s130
    %s132 = sphi 0, %s130
    %s133 = sphi 0, %s132
    %s147 = sphi 0, %s133
    %s153 = sphi 0, %s155
    %s156 = sphi 0, %s153
    %s157 = sphi 0, %s156
    %s173 = sphi 0, %s157
  $region4: #{kinship_forward.1} parent=0 // loop_header_branch
    %15 = sbr.rel (%p13) target = $region8
  $region5: #{kinship_forward.1} parent=0 // loop_body
    %s17 = ssub.s32 %s12, 1
    %s18 = ssub.s32 %s12, 2
    %s19 = sadd.s32 %s12, 1
    %s20 = ssub.s32 %s12, %s19
    %p21 = scmp.eq.s32.totalorder %s20, 0
    %s23 = sadd.s32 %s22, 1
    %s24 = scalar_select %p21, %s22, %s23
    %p27 = pneg %p21
    %p28 = scmp.eq.s32.totalorder %s12, 3
    %p29 = por %p27, %p28
    %p30 = scmp.ne.s32.totalorder %s22, %s25
    %p31 = scmp.eq.s32.totalorder %s12, 0
    %p32 = por %p30, %p31
    %p33 = scmp.ne.s32.totalorder %s22, %s25
    %p34 = scmp.eq.s32.totalorder %s17, 3
    %p35 = por %p33, %p34
    %p36 = scmp.ne.s32.totalorder %s25, %s26
    %p37 = scmp.eq.s32.totalorder %s17, 0
    %p38 = por %p36, %p37
    %p39 = scmp.ne.s32.totalorder %s25, %s26
    %p40 = scmp.eq.s32.totalorder %s18, 3
    %p41 = por %p39, %p40
    %p43 = scmp.ne.s32.totalorder %s26, %s42
    %p44 = scmp.eq.s32.totalorder %s18, 0
    %p45 = por %p43, %p44
    %s47 = sadd.s32 %s46, 1
    %p50 = scmp.eq.s32.totalorder %s12, 3
    %p51 = scmp.ne.s32.totalorder %s46, %s48
    %p52 = scmp.eq.s32.totalorder %s12, 0
    %p53 = por %p51, %p52
    %p54 = scmp.ne.s32.totalorder %s46, %s48
    %p55 = scmp.eq.s32.totalorder %s17, 3
    %p56 = por %p54, %p55
    %p57 = scmp.ne.s32.totalorder %s48, %s49
    %p58 = scmp.eq.s32.totalorder %s17, 0
    %p59 = por %p57, %p58
    %p60 = scmp.ne.s32.totalorder %s48, %s49
    %p61 = scmp.eq.s32.totalorder %s18, 3
    %p62 = por %p60, %p61
    %p64 = scmp.ne.s32.totalorder %s49, %s63
    %p65 = scmp.eq.s32.totalorder %s18, 0
    %p66 = por %p64, %p65
    %s68 = sadd.s32 %s67, 1
    %p71 = scmp.eq.s32.totalorder %s12, 3
    %p72 = scmp.ne.s32.totalorder %s67, %s69
    %p73 = scmp.eq.s32.totalorder %s12, 0
    %p74 = por %p72, %p73
    %p75 = scmp.ne.s32.totalorder %s67, %s69
    %p76 = scmp.eq.s32.totalorder %s17, 3
    %p77 = por %p75, %p76
    %p78 = scmp.ne.s32.totalorder %s69, %s70
    %p79 = scmp.eq.s32.totalorder %s17, 0
    %p80 = por %p78, %p79
    %p81 = scmp.ne.s32.totalorder %s69, %s70
    %p82 = scmp.eq.s32.totalorder %s18, 3
    %p83 = por %p81, %p82
    %p85 = scmp.ne.s32.totalorder %s70, %s84
    %p86 = scmp.eq.s32.totalorder %s18, 0
    %p87 = por %p85, %p86
    %s89 = sadd.s32 %s88, 1
    %p92 = scmp.eq.s32.totalorder %s12, 3
    %p93 = scmp.ne.s32.totalorder %s88, %s90
    %p94 = scmp.eq.s32.totalorder %s12, 0
    %p95 = por %p93, %p94
    %p96 = scmp.ne.s32.totalorder %s88, %s90
    %p97 = scmp.eq.s32.totalorder %s17, 3
    %p98 = por %p96, %p97
    %p99 = scmp.ne.s32.totalorder %s90, %s91
    %p100 = scmp.eq.s32.totalorder %s17, 0
    %p101 = por %p99, %p100
    %p102 = scmp.ne.s32.totalorder %s90, %s91
    %p103 = scmp.eq.s32.totalorder %s18, 3
    %p104 = por %p102, %p103
    %p106 = scmp.ne.s32.totalorder %s91, %s105
    %p107 = scmp.eq.s32.totalorder %s18, 0
    %p108 = por %p106, %p107
    %s110 = sadd.s32 %s109, 1
    %p113 = scmp.eq.s32.totalorder %s12, 3
    %p114 = scmp.ne.s32.totalorder %s109, %s111
    %p115 = scmp.eq.s32.totalorder %s12, 0
    %p116 = por %p114, %p115
    %p117 = scmp.ne.s32.totalorder %s109, %s111
    %p118 = scmp.eq.s32.totalorder %s17, 3
    %p119 = por %p117, %p118
    %p120 = scmp.ne.s32.totalorder %s111, %s112
    %p121 = scmp.eq.s32.totalorder %s17, 0
    %p122 = por %p120, %p121
    %p123 = scmp.ne.s32.totalorder %s111, %s112
    %p124 = scmp.eq.s32.totalorder %s18, 3
    %p125 = por %p123, %p124
    %p127 = scmp.ne.s32.totalorder %s112, %s126
    %p128 = scmp.eq.s32.totalorder %s18, 0
    %p129 = por %p127, %p128
    %s131 = sadd.s32 %s130, 1
    %p134 = scmp.eq.s32.totalorder %s12, 3
    %p135 = scmp.ne.s32.totalorder %s130, %s132
    %p136 = scmp.eq.s32.totalorder %s12, 0
    %p137 = por %p135, %p136
    %p138 = scmp.ne.s32.totalorder %s130, %s132
    %p139 = scmp.eq.s32.totalorder %s17, 3
    %p140 = por %p138, %p139
    %p141 = scmp.ne.s32.totalorder %s132, %s133
    %p142 = scmp.eq.s32.totalorder %s17, 0
    %p143 = por %p141, %p142
    %p144 = scmp.ne.s32.totalorder %s132, %s133
    %p145 = scmp.eq.s32.totalorder %s18, 3
    %p146 = por %p144, %p145
    %p148 = scmp.ne.s32.totalorder %s133, %s147
    %p149 = scmp.eq.s32.totalorder %s18, 0
    %p150 = por %p148, %p149
    %s151 = ssub.s32 %s12, %s19
    %p152 = scmp.eq.s32.totalorder %s151, 0
    %s154 = sadd.s32 %s153, 1
    %s155 = scalar_select %p152, %s153, %s154
    %p158 = pneg %p152
    %p159 = scmp.eq.s32.totalorder %s12, 3
    %p160 = por %p158, %p159
    %p161 = scmp.ne.s32.totalorder %s153, %s156
    %p162 = scmp.eq.s32.totalorder %s12, 0
    %p163 = por %p161, %p162
    %p164 = scmp.ne.s32.totalorder %s153, %s156
    %p165 = scmp.eq.s32.totalorder %s17, 3
    %p166 = por %p164, %p165
    %p167 = scmp.ne.s32.totalorder %s156, %s157
    %p168 = scmp.eq.s32.totalorder %s17, 0
    %p169 = por %p167, %p168
    %p170 = scmp.ne.s32.totalorder %s156, %s157
    %p171 = scmp.eq.s32.totalorder %s18, 3
    %p172 = por %p170, %p171
    %p174 = scmp.ne.s32.totalorder %s157, %s173
    %p175 = scmp.eq.s32.totalorder %s18, 0
    %p176 = por %p174, %p175
    %p177 = scmp.le.s32.totalorder 1, %s12
    %p178 = scmp.lt.s32.totalorder %s12, 5
    %p179 = pnand %p177, %p178
    %p180 = pneg %p179
    // Predicated region
    $region9: #{kinship_forward.1} parent=5 // pred_check
      _
    $region10: #{kinship_forward.1} parent=5 // pred_check_branch
      %182 = sbr.rel (%p179) target = $region12
    $region11: #{kinship_forward.1} parent=5 // pred_region
      %s183 = ssub.s32 %s12, 1
      // Predicated region
      $region13: #{kinship_forward.1} parent=11 // pred_check
        %p184 = pneg %p59
      $region14: #{kinship_forward.1} parent=11 // pred_check_branch
        %186 = sbr.rel (%p184) target = $region16
      $region15: #{kinship_forward.1} parent=11 // pred_region
        _
      $region16: #{kinship_forward.1} parent=11 // pred_fallthru
        _
      // Predicated region
      $region17: #{kinship_forward.1} parent=11 // pred_check
        %p187 = pneg %p80
      $region18: #{kinship_forward.1} parent=11 // pred_check_branch
        %189 = sbr.rel (%p187) target = $region20
      $region19: #{kinship_forward.1} parent=11 // pred_region
        _
      $region20: #{kinship_forward.1} parent=11 // pred_fallthru
        _
      // Predicated region
      $region21: #{kinship_forward.1} parent=11 // pred_check
        %p190 = pneg %p101
      $region22: #{kinship_forward.1} parent=11 // pred_check_branch
        %192 = sbr.rel (%p190) target = $region24
      $region23: #{kinship_forward.1} parent=11 // pred_region
        _
      $region24: #{kinship_forward.1} parent=11 // pred_fallthru
        _
      // Predicated region
      $region25: #{kinship_forward.1} parent=11 // pred_check
        %p193 = pneg %p122
      $region26: #{kinship_forward.1} parent=11 // pred_check_branch
        %195 = sbr.rel (%p193) target = $region28
      $region27: #{kinship_forward.1} parent=11 // pred_region
        _
      $region28: #{kinship_forward.1} parent=11 // pred_fallthru
        _
      // Predicated region
      $region29: #{kinship_forward.1} parent=11 // pred_check
        %p196 = pneg %p143
      $region30: #{kinship_forward.1} parent=11 // pred_check_branch
        %198 = sbr.rel (%p196) target = $region32
      $region31: #{kinship_forward.1} parent=11 // pred_region
        _
      $region32: #{kinship_forward.1} parent=11 // pred_fallthru
        _
    $region12: #{kinship_forward.1} parent=5 // pred_fallthru
      _
    %p199 = scmp.lt.s32.totalorder %s12, 4
    // Predicated region
    $region33: #{kinship_forward.1} parent=5 // pred_check
      %p200 = pneg %p199
    $region34: #{kinship_forward.1} parent=5 // pred_check_branch
      %202 = sbr.rel (%p200) target = $region36
    $region35: #{kinship_forward.1} parent=5 // pred_region
      // Predicated region
      $region37: #{kinship_forward.1} parent=35 // pred_check
        %p203 = pneg %p32
      $region38: #{kinship_forward.1} parent=35 // pred_check_branch
        %205 = sbr.rel (%p203) target = $region40
      $region39: #{kinship_forward.1} parent=35 // pred_region
        %p206 = scmp.lt.s32.totalorder %s12, 3
        %s207 = scalar_select %p206, %s12, 3
        %s208 = smul.addr %s207, 3
        %s209 = smul.addr %s208, 2
        %s210 = scalar_lea.vmem %s0, %s209
      $region40: #{kinship_forward.1} parent=35 // pred_fallthru
        _
    $region36: #{kinship_forward.1} parent=5 // pred_fallthru
      _
    %p211 = scmp.le.s32.totalorder 1, %s12
    %p212 = scmp.lt.s32.totalorder %s12, 5
    %p213 = pnand %p211, %p212
    %p214 = pneg %p213
    // Predicated region
    $region41: #{kinship_forward.1} parent=5 // pred_check
      _
    $region42: #{kinship_forward.1} parent=5 // pred_check_branch
      %216 = sbr.rel (%p213) target = $region44
    $region43: #{kinship_forward.1} parent=5 // pred_region
      %s217 = ssub.s32 %s12, 1
      %p218 = scmp.lt.s32.totalorder %s17, 3
      %s219 = scalar_select %p218, %s17, 3
      %s220 = smul.addr %s219, 3
      %s221 = smul.addr %s220, 2
      %s222 = scalar_lea.vmem %s0, %s221
      %p223 = pneg %p38
      %p224 = pneg %p35
      %p225 = pneg %p59
      %p226 = pneg %p56
      %p227 = pneg %p80
      %p228 = pneg %p77
      %p229 = pneg %p101
      %p230 = pneg %p98
      %p231 = pneg %p122
      %p232 = pneg %p119
      %p233 = pneg %p143
      %p234 = pneg %p140
      %p235 = pneg %p169
      %p236 = pneg %p166
      %p237 = scmp.lt.s32.totalorder %s17, 3
      %s238 = scalar_select %p237, %s17, 3
      %s239 = scalar_lea.vmem %s6, %s238
      %p240 = scmp.lt.s32.totalorder %s17, 3
      %s241 = scalar_select %p240, %s17, 3
      %s242 = smul.addr %s241, 3
      %s243 = smul.addr %s242, 2
      %s244 = scalar_lea.vmem %s0, %s243
      %p245 = scmp.lt.s32.totalorder %s17, 3
      %s246 = scalar_select %p245, %s17, 3
      %s247 = scalar_lea.vmem %s6, %s246
      %v249 = vld [vmem:[%s244] sm:$0x3f]
      %v250 = vld [vmem:[%s1] sm:$0xf]
      %v251 = vld [vmem:[%s1 + $0x4] sm:$0xf]
      %s252 = scalar_lea.vmem %s1, 8
      %v253 = vld [vmem:[%s252] sm:$0xf]
      %v254 = vld [vmem:[%s252 + $0x4] sm:$0xf]
      %v257 = vunpack.c.l.b16 %v253
      %v258 = vunpack.c.l.b16 %v254
      %v259 = vpack.c.b16 %v258, %v257
      %v261 = vcombine.high %v249, %v249
      %v263 = vunpack.c.l.s4 1983009808
      %v264 = vunpack.c.0.s8 %v263
      %v265 = vlaneseq
      %v266 = vshrl.u32 %v265, 7
      %v267 = vsub.s32 %v264, %v266
      %v268 = vrot.slane %v249, %v267
      %v270 = vunpack.c.l.s4 1983009808
      %v271 = vunpack.c.0.s8 %v270
      %v272 = vlaneseq
      %v273 = vshrl.u32 %v272, 7
      %v274 = vsub.s32 %v271, %v273
      %v275 = vrot.slane %v261, %v274
      %v276 = vcombine.high %v268, %v268
      %277 = vrot.lane.b32.xlu0 %v268, 127
      %v278 = vpop.permute.xlu0 %277
      %279 = vrot.lane.b32.xlu0 %v276, 127
      %v280 = vpop.permute.xlu0 %279
      %281 = vrot.lane.b32.xlu0 %v275, 127
      %v282 = vpop.permute.xlu0 %281
      %vm283 = vcmask 1039360
      %v284 = vsel %vm283, %v278, %v280
      %v285 = vsel %vm283, %v280, %v282
      %vm286 = vcmask 23552
      %v288 = vsel %vm286, %v259, 0
      %vm290 = vcmask 1040384
      %vm291 = vcmask 1041408
      %v292 = vsel %vm290, 4294967295, 65535
      %v293 = vsel %vm291, %v292, 0
      %v295 = vand.u32 %v284, %v293
      %v298 = vand.u32 %v285, %v293
      %v301 = vand.u32 %v282, %v293
      %303 = vmatprep.subr.bf16.mxu0 %v298
      %304 = vmatpush1.bf16.msra.mxu0 %v295
      %305 = vmatprep.subr.bf16.mxu0 0
      %306 = vmatpush1.bf16.msra.mxu0 0
      %307 = vmatprep.subr.bf16.mxu0 0
      %308 = vmatpush1.bf16.msra.mxu0 0
      %309 = vmatprep.subr.bf16.mxu0 0
      %310 = vmatpush1.bf16.msra.mxu0 0
      %311 = vmatprep.subr.bf16.mxu0 0
      %312 = vmatpush1.bf16.msra.mxu0 0
      %313 = vmatprep.subr.bf16.mxu0 0
      %314 = vmatpush1.bf16.msra.mxu0 0
      %315 = vmatprep.subr.bf16.mxu0 0
      %316 = vmatpush1.bf16.msra.mxu0 0
      %317 = vmatprep.subr.bf16.mxu0 0
      %318 = vmatpush1.bf16.msra.mxu0 0
      %319 = vmatprep.subr.bf16.mxu0 0
      %320 = vmatpush1.bf16.msra.mxu0 0
      %321 = vmatprep.subr.bf16.mxu0 0
      %322 = vmatpush1.bf16.msra.mxu0 0
      %323 = vmatprep.subr.bf16.mxu0 0
      %324 = vmatpush1.bf16.msra.mxu0 0
      %325 = vmatprep.subr.bf16.mxu0 0
      %326 = vmatpush1.bf16.msra.mxu0 0
      %327 = vmatprep.subr.bf16.mxu0 0
      %328 = vmatpush1.bf16.msra.mxu0 0
      %329 = vmatprep.subr.bf16.mxu0 0
      %330 = vmatpush1.bf16.msra.mxu0 0
      %331 = vmatprep.subr.bf16.mxu0 0
      %332 = vmatpush1.bf16.msra.mxu0 0
      %333 = vmatprep.subr.bf16.mxu0 0
      %334 = vmatpush1.bf16.msra.mxu0 0
      %335 = vmatprep.mubr.bf16.mxu0 0
      %336 = vmatmul.mubr.bf16.gmra.mrb[0].mxu0 %v288
      %v337 = vpop.f32.mrb[0].mxu0
      %v338 = vadd.f32 0.0, %v337
      %v339 = vpop.f32.mrb[0].mxu0
      %v340 = vadd.f32 0.0, %v339
      %v341 = vpop.f32.mrb[0].mxu0
      %v342 = vadd.f32 0.0, %v341
      %v343 = vpop.f32.mrb[0].mxu0
      %v344 = vadd.f32 0.0, %v343
      %345 = vdwg.mxu0
      %346 = vmatprep.subr.bf16.mxu0 0
      %347 = vmatpush1.bf16.msra.mxu0 %v301
      %348 = vmatprep.subr.bf16.mxu0 0
      %349 = vmatpush1.bf16.msra.mxu0 0
      %350 = vmatprep.subr.bf16.mxu0 0
      %351 = vmatpush1.bf16.msra.mxu0 0
      %352 = vmatprep.subr.bf16.mxu0 0
      %353 = vmatpush1.bf16.msra.mxu0 0
      %354 = vmatprep.subr.bf16.mxu0 0
      %355 = vmatpush1.bf16.msra.mxu0 0
      %356 = vmatprep.subr.bf16.mxu0 0
      %357 = vmatpush1.bf16.msra.mxu0 0
      %358 = vmatprep.subr.bf16.mxu0 0
      %359 = vmatpush1.bf16.msra.mxu0 0
      %360 = vmatprep.subr.bf16.mxu0 0
      %361 = vmatpush1.bf16.msra.mxu0 0
      %362 = vmatprep.subr.bf16.mxu0 0
      %363 = vmatpush1.bf16.msra.mxu0 0
      %364 = vmatprep.subr.bf16.mxu0 0
      %365 = vmatpush1.bf16.msra.mxu0 0
      %366 = vmatprep.subr.bf16.mxu0 0
      %367 = vmatpush1.bf16.msra.mxu0 0
      %368 = vmatprep.subr.bf16.mxu0 0
      %369 = vmatpush1.bf16.msra.mxu0 0
      %370 = vmatprep.subr.bf16.mxu0 0
      %371 = vmatpush1.bf16.msra.mxu0 0
      %372 = vmatprep.subr.bf16.mxu0 0
      %373 = vmatpush1.bf16.msra.mxu0 0
      %374 = vmatprep.subr.bf16.mxu0 0
      %375 = vmatpush1.bf16.msra.mxu0 0
      %376 = vmatprep.subr.bf16.mxu0 0
      %377 = vmatpush1.bf16.msra.mxu0 0
      %378 = vmatprep.mubr.bf16.mxu0 0
      %379 = vmatmul.mubr.bf16.gmra.mrb[0].mxu0 %v288
      %v380 = vpop.f32.mrb[0].mxu0
      %v381 = vadd.f32 0.0, %v380
      %v382 = vpop.f32.mrb[0].mxu0
      %v383 = vpop.f32.mrb[0].mxu0
      %v384 = vadd.f32 0.0, %v383
      %v385 = vpop.f32.mrb[0].mxu0
      %386 = vdwg.mxu0
      %v389 = vunpack.c.l.b16 %v250
      %v390 = vunpack.c.l.b16 %v251
      %v391 = vpack.c.b16 %v390, %v389
      %v393 = vsel %vm286, %v391, 0
      %v396 = vand.u32 %v268, %v293
      %v399 = vand.u32 %v276, %v293
      %v402 = vand.u32 %v275, %v293
      %404 = vmatprep.subr.bf16.mxu0 %v399
      %405 = vmatpush1.bf16.msra.mxu0 %v396
      %406 = vmatprep.subr.bf16.mxu0 0
      %407 = vmatpush1.bf16.msra.mxu0 0
      %408 = vmatprep.subr.bf16.mxu0 0
      %409 = vmatpush1.bf16.msra.mxu0 0
      %410 = vmatprep.subr.bf16.mxu0 0
      %411 = vmatpush1.bf16.msra.mxu0 0
      %412 = vmatprep.subr.bf16.mxu0 0
      %413 = vmatpush1.bf16.msra.mxu0 0
      %414 = vmatprep.subr.bf16.mxu0 0
      %415 = vmatpush1.bf16.msra.mxu0 0
      %416 = vmatprep.subr.bf16.mxu0 0
      %417 = vmatpush1.bf16.msra.mxu0 0
      %418 = vmatprep.subr.bf16.mxu0 0
      %419 = vmatpush1.bf16.msra.mxu0 0
      %420 = vmatprep.subr.bf16.mxu0 0
      %421 = vmatpush1.bf16.msra.mxu0 0
      %422 = vmatprep.subr.bf16.mxu0 0
      %423 = vmatpush1.bf16.msra.mxu0 0
      %424 = vmatprep.subr.bf16.mxu0 0
      %425 = vmatpush1.bf16.msra.mxu0 0
      %426 = vmatprep.subr.bf16.mxu0 0
      %427 = vmatpush1.bf16.msra.mxu0 0
      %428 = vmatprep.subr.bf16.mxu0 0
      %429 = vmatpush1.bf16.msra.mxu0 0
      %430 = vmatprep.subr.bf16.mxu0 0
      %431 = vmatpush1.bf16.msra.mxu0 0
      %432 = vmatprep.subr.bf16.mxu0 0
      %433 = vmatpush1.bf16.msra.mxu0 0
      %434 = vmatprep.subr.bf16.mxu0 0
      %435 = vmatpush1.bf16.msra.mxu0 0
      %436 = vmatprep.mubr.bf16.mxu0 0
      %437 = vmatmul.mubr.bf16.gmra.mrb[0].mxu0 %v393
      %v438 = vpop.f32.mrb[0].mxu0
      %v439 = vadd.f32 %v338, %v438
      %v440 = vpop.f32.mrb[0].mxu0
      %v441 = vadd.f32 %v340, %v440
      %v442 = vpop.f32.mrb[0].mxu0
      %v443 = vadd.f32 %v342, %v442
      %v444 = vpop.f32.mrb[0].mxu0
      %v445 = vadd.f32 %v344, %v444
      %446 = vdwg.mxu0
      %447 = vmatprep.subr.bf16.mxu0 0
      %448 = vmatpush1.bf16.msra.mxu0 %v402
      %449 = vmatprep.subr.bf16.mxu0 0
      %450 = vmatpush1.bf16.msra.mxu0 0
      %451 = vmatprep.subr.bf16.mxu0 0
      %452 = vmatpush1.bf16.msra.mxu0 0
      %453 = vmatprep.subr.bf16.mxu0 0
      %454 = vmatpush1.bf16.msra.mxu0 0
      %455 = vmatprep.subr.bf16.mxu0 0
      %456 = vmatpush1.bf16.msra.mxu0 0
      %457 = vmatprep.subr.bf16.mxu0 0
      %458 = vmatpush1.bf16.msra.mxu0 0
      %459 = vmatprep.subr.bf16.mxu0 0
      %460 = vmatpush1.bf16.msra.mxu0 0
      %461 = vmatprep.subr.bf16.mxu0 0
      %462 = vmatpush1.bf16.msra.mxu0 0
      %463 = vmatprep.subr.bf16.mxu0 0
      %464 = vmatpush1.bf16.msra.mxu0 0
      %465 = vmatprep.subr.bf16.mxu0 0
      %466 = vmatpush1.bf16.msra.mxu0 0
      %467 = vmatprep.subr.bf16.mxu0 0
      %468 = vmatpush1.bf16.msra.mxu0 0
      %469 = vmatprep.subr.bf16.mxu0 0
      %470 = vmatpush1.bf16.msra.mxu0 0
      %471 = vmatprep.subr.bf16.mxu0 0
      %472 = vmatpush1.bf16.msra.mxu0 0
      %473 = vmatprep.subr.bf16.mxu0 0
      %474 = vmatpush1.bf16.msra.mxu0 0
      %475 = vmatprep.subr.bf16.mxu0 0
      %476 = vmatpush1.bf16.msra.mxu0 0
      %477 = vmatprep.subr.bf16.mxu0 0
      %478 = vmatpush1.bf16.msra.mxu0 0
      %479 = vmatprep.mubr.bf16.mxu0 0
      %480 = vmatmul.mubr.bf16.gmra.mrb[0].mxu0 %v393
      %v481 = vpop.f32.mrb[0].mxu0
      %v482 = vadd.f32 %v381, %v481
      %v483 = vpop.f32.mrb[0].mxu0
      %v484 = vpop.f32.mrb[0].mxu0
      %v485 = vadd.f32 %v384, %v484
      %v486 = vpop.f32.mrb[0].mxu0
      %487 = vdwg.mxu0
      %v488 = vld [vmem:[%s244] sm:$0x3f]
      %s489 = scalar_lea.vmem %s1, 16
      %v490 = vld [vmem:[%s489] sm:$0xf]
      %v491 = vld [vmem:[%s489 + $0x4] sm:$0xf]
      %v494 = vunpack.c.l.b16 %v490
      %v495 = vunpack.c.l.b16 %v491
      %v496 = vpack.c.b16 %v495, %v494
      %v498 = vcombine.high %v488, %v488
      %v500 = vunpack.c.l.s4 1983009808
      %v501 = vunpack.c.0.s8 %v500
      %v502 = vlaneseq
      %v503 = vshrl.u32 %v502, 7
      %v504 = vsub.s32 %v501, %v503
      %v505 = vrot.slane %v488, %v504
      %v507 = vunpack.c.l.s4 1983009808
      %v508 = vunpack.c.0.s8 %v507
      %v509 = vlaneseq
      %v510 = vshrl.u32 %v509, 7
      %v511 = vsub.s32 %v508, %v510
      %v512 = vrot.slane %v498, %v511
      %v513 = vcombine.high %v505, %v505
      %514 = vrot.lane.b32.xlu0 %v505, 126
      %v515 = vpop.permute.xlu0 %514
      %516 = vrot.lane.b32.xlu0 %v513, 126
      %v517 = vpop.permute.xlu0 %516
      %518 = vrot.lane.b32.xlu0 %v512, 126
      %v519 = vpop.permute.xlu0 %518
      %vm520 = vcmask 1031168
      %v521 = vsel %vm520, %v515, %v517
      %v522 = vsel %vm520, %v517, %v519
      %v524 = vsel %vm286, %v496, 0
      %v527 = vand.u32 %v521, %v293
      %v530 = vand.u32 %v522, %v293
      %v533 = vand.u32 %v519, %v293
      %535 = vmatprep.subr.bf16.mxu0 %v530
      %536 = vmatpush1.bf16.msra.mxu0 %v527
      %537 = vmatprep.subr.bf16.mxu0 0
      %538 = vmatpush1.bf16.msra.mxu0 0
      %539 = vmatprep.subr.bf16.mxu0 0
      %540 = vmatpush1.bf16.msra.mxu0 0
      %541 = vmatprep.subr.bf16.mxu0 0
      %542 = vmatpush1.bf16.msra.mxu0 0
      %543 = vmatprep.subr.bf16.mxu0 0
      %544 = vmatpush1.bf16.msra.mxu0 0
      %545 = vmatprep.subr.bf16.mxu0 0
      %546 = vmatpush1.bf16.msra.mxu0 0
      %547 = vmatprep.subr.bf16.mxu0 0
      %548 = vmatpush1.bf16.msra.mxu0 0
      %549 = vmatprep.subr.bf16.mxu0 0
      %550 = vmatpush1.bf16.msra.mxu0 0
      %551 = vmatprep.subr.bf16.mxu0 0
      %552 = vmatpush1.bf16.msra.mxu0 0
      %553 = vmatprep.subr.bf16.mxu0 0
      %554 = vmatpush1.bf16.msra.mxu0 0
      %555 = vmatprep.subr.bf16.mxu0 0
      %556 = vmatpush1.bf16.msra.mxu0 0
      %557 = vmatprep.subr.bf16.mxu0 0
      %558 = vmatpush1.bf16.msra.mxu0 0
      %559 = vmatprep.subr.bf16.mxu0 0
      %560 = vmatpush1.bf16.msra.mxu0 0
      %561 = vmatprep.subr.bf16.mxu0 0
      %562 = vmatpush1.bf16.msra.mxu0 0
      %563 = vmatprep.subr.bf16.mxu0 0
      %564 = vmatpush1.bf16.msra.mxu0 0
      %565 = vmatprep.subr.bf16.mxu0 0
      %566 = vmatpush1.bf16.msra.mxu0 0
      %567 = vmatprep.mubr.bf16.mxu0 0
      %568 = vmatmul.mubr.bf16.gmra.mrb[0].mxu0 %v524
      %v569 = vpop.f32.mrb[0].mxu0
      %v570 = vadd.f32 0.0, %v569
      %v571 = vpop.f32.mrb[0].mxu0
      %v572 = vadd.f32 0.0, %v571
      %v573 = vpop.f32.mrb[0].mxu0
      %v574 = vadd.f32 0.0, %v573
      %v575 = vpop.f32.mrb[0].mxu0
      %v576 = vadd.f32 0.0, %v575
      %577 = vdwg.mxu0
      %578 = vmatprep.subr.bf16.mxu0 0
      %579 = vmatpush1.bf16.msra.mxu0 %v533
      %580 = vmatprep.subr.bf16.mxu0 0
      %581 = vmatpush1.bf16.msra.mxu0 0
      %582 = vmatprep.subr.bf16.mxu0 0
      %583 = vmatpush1.bf16.msra.mxu0 0
      %584 = vmatprep.subr.bf16.mxu0 0
      %585 = vmatpush1.bf16.msra.mxu0 0
      %586 = vmatprep.subr.bf16.mxu0 0
      %587 = vmatpush1.bf16.msra.mxu0 0
      %588 = vmatprep.subr.bf16.mxu0 0
      %589 = vmatpush1.bf16.msra.mxu0 0
      %590 = vmatprep.subr.bf16.mxu0 0
      %591 = vmatpush1.bf16.msra.mxu0 0
      %592 = vmatprep.subr.bf16.mxu0 0
      %593 = vmatpush1.bf16.msra.mxu0 0
      %594 = vmatprep.subr.bf16.mxu0 0
      %595 = vmatpush1.bf16.msra.mxu0 0
      %596 = vmatprep.subr.bf16.mxu0 0
      %597 = vmatpush1.bf16.msra.mxu0 0
      %598 = vmatprep.subr.bf16.mxu0 0
      %599 = vmatpush1.bf16.msra.mxu0 0
      %600 = vmatprep.subr.bf16.mxu0 0
      %601 = vmatpush1.bf16.msra.mxu0 0
      %602 = vmatprep.subr.bf16.mxu0 0
      %603 = vmatpush1.bf16.msra.mxu0 0
      %604 = vmatprep.subr.bf16.mxu0 0
      %605 = vmatpush1.bf16.msra.mxu0 0
      %606 = vmatprep.subr.bf16.mxu0 0
      %607 = vmatpush1.bf16.msra.mxu0 0
      %608 = vmatprep.subr.bf16.mxu0 0
      %609 = vmatpush1.bf16.msra.mxu0 0
      %610 = vmatprep.mubr.bf16.mxu0 0
      %611 = vmatmul.mubr.bf16.gmra.mrb[0].mxu0 %v524
      %v612 = vpop.f32.mrb[0].mxu0
      %v613 = vadd.f32 0.0, %v612
      %v614 = vpop.f32.mrb[0].mxu0
      %v615 = vpop.f32.mrb[0].mxu0
      %v616 = vadd.f32 0.0, %v615
      %v617 = vpop.f32.mrb[0].mxu0
      %618 = vdwg.mxu0
      %v619 = vadd.f32 %v439, %v570
      %v620 = vadd.f32 %v441, %v572
      %v621 = vadd.f32 %v482, %v613
      %v622 = vadd.f32 %v443, %v574
      %v623 = vadd.f32 %v445, %v576
      %v624 = vadd.f32 %v485, %v616
      %v625 = vld [vmem:[%s244] sm:$0x3f]
      %s626 = scalar_lea.vmem %s1, 24
      %v627 = vld [vmem:[%s626] sm:$0xf]
      %v628 = vld [vmem:[%s626 + $0x4] sm:$0xf]
      %v631 = vunpack.c.l.b16 %v627
      %v632 = vunpack.c.l.b16 %v628
      %v633 = vpack.c.b16 %v632, %v631
      %v635 = vcombine.high %v625, %v625
      %v637 = vunpack.c.l.s4 1983009808
      %v638 = vunpack.c.0.s8 %v637
      %v639 = vlaneseq
      %v640 = vshrl.u32 %v639, 7
      %v641 = vsub.s32 %v638, %v640
      %v642 = vrot.slane %v625, %v641
      %v644 = vunpack.c.l.s4 1983009808
      %v645 = vunpack.c.0.s8 %v644
      %v646 = vlaneseq
      %v647 = vshrl.u32 %v646, 7
      %v648 = vsub.s32 %v645, %v647
      %v649 = vrot.slane %v635, %v648
      %v650 = vcombine.high %v642, %v642
      %651 = vrot.lane.b32.xlu0 %v642, 110
      %v652 = vpop.permute.xlu0 %651
      %653 = vrot.lane.b32.xlu0 %v650, 110
      %v654 = vpop.permute.xlu0 %653
      %655 = vrot.lane.b32.xlu0 %v649, 110
      %v656 = vpop.permute.xlu0 %655
      %vm657 = vcmask 900096
      %v658 = vsel %vm657, %v652, %v654
      %v659 = vsel %vm657, %v654, %v656
      %v661 = vsel %vm286, %v633, 0
      %v664 = vand.u32 %v658, %v293
      %v667 = vand.u32 %v659, %v293
      %v670 = vand.u32 %v656, %v293
      %672 = vmatprep.subr.bf16.mxu0 %v667
      %673 = vmatpush1.bf16.msra.mxu0 %v664
      %674 = vmatprep.subr.bf16.mxu0 0
      %675 = vmatpush1.bf16.msra.mxu0 0
      %676 = vmatprep.subr.bf16.mxu0 0
      %677 = vmatpush1.bf16.msra.mxu0 0
      %678 = vmatprep.subr.bf16.mxu0 0
      %679 = vmatpush1.bf16.msra.mxu0 0
      %680 = vmatprep.subr.bf16.mxu0 0
      %681 = vmatpush1.bf16.msra.mxu0 0
      %682 = vmatprep.subr.bf16.mxu0 0
      %683 = vmatpush1.bf16.msra.mxu0 0
      %684 = vmatprep.subr.bf16.mxu0 0
      %685 = vmatpush1.bf16.msra.mxu0 0
      %686 = vmatprep.subr.bf16.mxu0 0
      %687 = vmatpush1.bf16.msra.mxu0 0
      %688 = vmatprep.subr.bf16.mxu0 0
      %689 = vmatpush1.bf16.msra.mxu0 0
      %690 = vmatprep.subr.bf16.mxu0 0
      %691 = vmatpush1.bf16.msra.mxu0 0
      %692 = vmatprep.subr.bf16.mxu0 0
      %693 = vmatpush1.bf16.msra.mxu0 0
      %694 = vmatprep.subr.bf16.mxu0 0
      %695 = vmatpush1.bf16.msra.mxu0 0
      %696 = vmatprep.subr.bf16.mxu0 0
      %697 = vmatpush1.bf16.msra.mxu0 0
      %698 = vmatprep.subr.bf16.mxu0 0
      %699 = vmatpush1.bf16.msra.mxu0 0
      %700 = vmatprep.subr.bf16.mxu0 0
      %701 = vmatpush1.bf16.msra.mxu0 0
      %702 = vmatprep.subr.bf16.mxu0 0
      %703 = vmatpush1.bf16.msra.mxu0 0
      %704 = vmatprep.mubr.bf16.mxu0 0
      %705 = vmatmul.mubr.bf16.gmra.mrb[0].mxu0 %v661
      %v706 = vpop.f32.mrb[0].mxu0
      %v707 = vadd.f32 0.0, %v706
      %v708 = vpop.f32.mrb[0].mxu0
      %v709 = vadd.f32 0.0, %v708
      %v710 = vpop.f32.mrb[0].mxu0
      %v711 = vadd.f32 0.0, %v710
      %v712 = vpop.f32.mrb[0].mxu0
      %v713 = vadd.f32 0.0, %v712
      %714 = vdwg.mxu0
      %715 = vmatprep.subr.bf16.mxu0 0
      %716 = vmatpush1.bf16.msra.mxu0 %v670
      %717 = vmatprep.subr.bf16.mxu0 0
      %718 = vmatpush1.bf16.msra.mxu0 0
      %719 = vmatprep.subr.bf16.mxu0 0
      %720 = vmatpush1.bf16.msra.mxu0 0
      %721 = vmatprep.subr.bf16.mxu0 0
      %722 = vmatpush1.bf16.msra.mxu0 0
      %723 = vmatprep.subr.bf16.mxu0 0
      %724 = vmatpush1.bf16.msra.mxu0 0
      %725 = vmatprep.subr.bf16.mxu0 0
      %726 = vmatpush1.bf16.msra.mxu0 0
      %727 = vmatprep.subr.bf16.mxu0 0
      %728 = vmatpush1.bf16.msra.mxu0 0
      %729 = vmatprep.subr.bf16.mxu0 0
      %730 = vmatpush1.bf16.msra.mxu0 0
      %731 = vmatprep.subr.bf16.mxu0 0
      %732 = vmatpush1.bf16.msra.mxu0 0
      %733 = vmatprep.subr.bf16.mxu0 0
      %734 = vmatpush1.bf16.msra.mxu0 0
      %735 = vmatprep.subr.bf16.mxu0 0
      %736 = vmatpush1.bf16.msra.mxu0 0
      %737 = vmatprep.subr.bf16.mxu0 0
      %738 = vmatpush1.bf16.msra.mxu0 0
      %739 = vmatprep.subr.bf16.mxu0 0
      %740 = vmatpush1.bf16.msra.mxu0 0
      %741 = vmatprep.subr.bf16.mxu0 0
      %742 = vmatpush1.bf16.msra.mxu0 0
      %743 = vmatprep.subr.bf16.mxu0 0
      %744 = vmatpush1.bf16.msra.mxu0 0
      %745 = vmatprep.subr.bf16.mxu0 0
      %746 = vmatpush1.bf16.msra.mxu0 0
      %747 = vmatprep.mubr.bf16.mxu0 0
      %748 = vmatmul.mubr.bf16.gmra.mrb[0].mxu0 %v661
      %v749 = vpop.f32.mrb[0].mxu0
      %v750 = vadd.f32 0.0, %v749
      %v751 = vpop.f32.mrb[0].mxu0
      %v752 = vpop.f32.mrb[0].mxu0
      %v753 = vadd.f32 0.0, %v752
      %v754 = vpop.f32.mrb[0].mxu0
      %755 = vdwg.mxu0
      %v756 = vadd.f32 %v619, %v707
      %v757 = vadd.f32 %v620, %v709
      %v758 = vadd.f32 %v621, %v750
      %v759 = vadd.f32 %v622, %v711
      %v760 = vadd.f32 %v623, %v713
      %v761 = vadd.f32 %v624, %v753
      %v762 = vld [vmem:[%s244] sm:$0x3f]
      %s763 = scalar_lea.vmem %s1, 32
      %v764 = vld [vmem:[%s763] sm:$0xf]
      %v765 = vld [vmem:[%s763 + $0x4] sm:$0xf]
      %v768 = vunpack.c.l.b16 %v764
      %v769 = vunpack.c.l.b16 %v765
      %v770 = vpack.c.b16 %v769, %v768
      %v772 = vcombine.high %v762, %v762
      %v774 = vunpack.c.l.s4 1983009808
      %v775 = vunpack.c.0.s8 %v774
      %v776 = vlaneseq
      %v777 = vshrl.u32 %v776, 7
      %v778 = vsub.s32 %v775, %v777
      %v779 = vrot.slane %v762, %v778
      %v781 = vunpack.c.l.s4 1983009808
      %v782 = vunpack.c.0.s8 %v781
      %v783 = vlaneseq
      %v784 = vshrl.u32 %v783, 7
      %v785 = vsub.s32 %v782, %v784
      %v786 = vrot.slane %v772, %v785
      %v787 = vcombine.high %v779, %v779
      %788 = vrot.lane.b32.xlu0 %v779, 109
      %v789 = vpop.permute.xlu0 %788
      %790 = vrot.lane.b32.xlu0 %v787, 109
      %v791 = vpop.permute.xlu0 %790
      %792 = vrot.lane.b32.xlu0 %v786, 109
      %v793 = vpop.permute.xlu0 %792
      %vm794 = vcmask 891904
      %v795 = vsel %vm794, %v789, %v791
      %v796 = vsel %vm794, %v791, %v793
      %v798 = vsel %vm286, %v770, 0
      %v801 = vand.u32 %v795, %v293
      %v804 = vand.u32 %v796, %v293
      %v807 = vand.u32 %v793, %v293
      %809 = vmatprep.subr.bf16.mxu0 %v804
      %810 = vmatpush1.bf16.msra.mxu0 %v801
      %811 = vmatprep.subr.bf16.mxu0 0
      %812 = vmatpush1.bf16.msra.mxu0 0
      %813 = vmatprep.subr.bf16.mxu0 0
      %814 = vmatpush1.bf16.msra.mxu0 0
      %815 = vmatprep.subr.bf16.mxu0 0
      %816 = vmatpush1.bf16.msra.mxu0 0
      %817 = vmatprep.subr.bf16.mxu0 0
      %818 = vmatpush1.bf16.msra.mxu0 0
      %819 = vmatprep.subr.bf16.mxu0 0
      %820 = vmatpush1.bf16.msra.mxu0 0
      %821 = vmatprep.subr.bf16.mxu0 0
      %822 = vmatpush1.bf16.msra.mxu0 0
      %823 = vmatprep.subr.bf16.mxu0 0
      %824 = vmatpush1.bf16.msra.mxu0 0
      %825 = vmatprep.subr.bf16.mxu0 0
      %826 = vmatpush1.bf16.msra.mxu0 0
      %827 = vmatprep.subr.bf16.mxu0 0
      %828 = vmatpush1.bf16.msra.mxu0 0
      %829 = vmatprep.subr.bf16.mxu0 0
      %830 = vmatpush1.bf16.msra.mxu0 0
      %831 = vmatprep.subr.bf16.mxu0 0
      %832 = vmatpush1.bf16.msra.mxu0 0
      %833 = vmatprep.subr.bf16.mxu0 0
      %834 = vmatpush1.bf16.msra.mxu0 0
      %835 = vmatprep.subr.bf16.mxu0 0
      %836 = vmatpush1.bf16.msra.mxu0 0
      %837 = vmatprep.subr.bf16.mxu0 0
      %838 = vmatpush1.bf16.msra.mxu0 0
      %839 = vmatprep.subr.bf16.mxu0 0
      %840 = vmatpush1.bf16.msra.mxu0 0
      %841 = vmatprep.mubr.bf16.mxu0 0
      %842 = vmatmul.mubr.bf16.gmra.mrb[0].mxu0 %v798
      %v843 = vpop.f32.mrb[0].mxu0
      %v844 = vadd.f32 0.0, %v843
      %v845 = vpop.f32.mrb[0].mxu0
      %v846 = vadd.f32 0.0, %v845
      %v847 = vpop.f32.mrb[0].mxu0
      %v848 = vadd.f32 0.0, %v847
      %v849 = vpop.f32.mrb[0].mxu0
      %v850 = vadd.f32 0.0, %v849
      %851 = vdwg.mxu0
      %852 = vmatprep.subr.bf16.mxu0 0
      %853 = vmatpush1.bf16.msra.mxu0 %v807
      %854 = vmatprep.subr.bf16.mxu0 0
      %855 = vmatpush1.bf16.msra.mxu0 0
      %856 = vmatprep.subr.bf16.mxu0 0
      %857 = vmatpush1.bf16.msra.mxu0 0
      %858 = vmatprep.subr.bf16.mxu0 0
      %859 = vmatpush1.bf16.msra.mxu0 0
      %860 = vmatprep.subr.bf16.mxu0 0
      %861 = vmatpush1.bf16.msra.mxu0 0
      %862 = vmatprep.subr.bf16.mxu0 0
      %863 = vmatpush1.bf16.msra.mxu0 0
      %864 = vmatprep.subr.bf16.mxu0 0
      %865 = vmatpush1.bf16.msra.mxu0 0
      %866 = vmatprep.subr.bf16.mxu0 0
      %867 = vmatpush1.bf16.msra.mxu0 0
      %868 = vmatprep.subr.bf16.mxu0 0
      %869 = vmatpush1.bf16.msra.mxu0 0
      %870 = vmatprep.subr.bf16.mxu0 0
      %871 = vmatpush1.bf16.msra.mxu0 0
      %872 = vmatprep.subr.bf16.mxu0 0
      %873 = vmatpush1.bf16.msra.mxu0 0
      %874 = vmatprep.subr.bf16.mxu0 0
      %875 = vmatpush1.bf16.msra.mxu0 0
      %876 = vmatprep.subr.bf16.mxu0 0
      %877 = vmatpush1.bf16.msra.mxu0 0
      %878 = vmatprep.subr.bf16.mxu0 0
      %879 = vmatpush1.bf16.msra.mxu0 0
      %880 = vmatprep.subr.bf16.mxu0 0
      %881 = vmatpush1.bf16.msra.mxu0 0
      %882 = vmatprep.subr.bf16.mxu0 0
      %883 = vmatpush1.bf16.msra.mxu0 0
      %884 = vmatprep.mubr.bf16.mxu0 0
      %885 = vmatmul.mubr.bf16.gmra.mrb[0].mxu0 %v798
      %v886 = vpop.f32.mrb[0].mxu0
      %v887 = vadd.f32 0.0, %v886
      %v888 = vpop.f32.mrb[0].mxu0
      %v889 = vpop.f32.mrb[0].mxu0
      %v890 = vadd.f32 0.0, %v889
      %v891 = vpop.f32.mrb[0].mxu0
      %892 = vdwg.mxu0
      %v893 = vadd.f32 %v756, %v844
      %v894 = vadd.f32 %v757, %v846
      %v895 = vadd.f32 %v758, %v887
      %v896 = vadd.f32 %v759, %v848
      %v897 = vadd.f32 %v760, %v850
      %v898 = vadd.f32 %v761, %v890
      %v899 = vld [vmem:[%s244] sm:$0x3f]
      %s900 = scalar_lea.vmem %s1, 40
      %v901 = vld [vmem:[%s900] sm:$0xf]
      %v902 = vld [vmem:[%s900 + $0x4] sm:$0xf]
      %v905 = vunpack.c.l.b16 %v901
      %v906 = vunpack.c.l.b16 %v902
      %v907 = vpack.c.b16 %v906, %v905
      %v909 = vcombine.high %v899, %v899
      %v911 = vunpack.c.l.s4 1983009808
      %v912 = vunpack.c.0.s8 %v911
      %v913 = vlaneseq
      %v914 = vshrl.u32 %v913, 7
      %v915 = vsub.s32 %v912, %v914
      %v916 = vrot.slane %v899, %v915
      %v918 = vunpack.c.l.s4 1983009808
      %v919 = vunpack.c.0.s8 %v918
      %v920 = vlaneseq
      %v921 = vshrl.u32 %v920, 7
      %v922 = vsub.s32 %v919, %v921
      %v923 = vrot.slane %v909, %v922
      %v924 = vcombine.high %v916, %v916
      %925 = vrot.lane.b32.xlu0 %v916, 108
      %v926 = vpop.permute.xlu0 %925
      %927 = vrot.lane.b32.xlu0 %v924, 108
      %v928 = vpop.permute.xlu0 %927
      %929 = vrot.lane.b32.xlu0 %v923, 108
      %v930 = vpop.permute.xlu0 %929
      %vm931 = vcmask 883712
      %v932 = vsel %vm931, %v926, %v928
      %v933 = vsel %vm931, %v928, %v930
      %v935 = vsel %vm286, %v907, 0
      %v938 = vand.u32 %v932, %v293
      %v941 = vand.u32 %v933, %v293
      %v944 = vand.u32 %v930, %v293
      %946 = vmatprep.subr.bf16.mxu0 %v941
      %947 = vmatpush1.bf16.msra.mxu0 %v938
      %948 = vmatprep.subr.bf16.mxu0 0
      %949 = vmatpush1.bf16.msra.mxu0 0
      %950 = vmatprep.subr.bf16.mxu0 0
      %951 = vmatpush1.bf16.msra.mxu0 0
      %952 = vmatprep.subr.bf16.mxu0 0
      %953 = vmatpush1.bf16.msra.mxu0 0
      %954 = vmatprep.subr.bf16.mxu0 0
      %955 = vmatpush1.bf16.msra.mxu0 0
      %956 = vmatprep.subr.bf16.mxu0 0
      %957 = vmatpush1.bf16.msra.mxu0 0
      %958 = vmatprep.subr.bf16.mxu0 0
      %959 = vmatpush1.bf16.msra.mxu0 0
      %960 = vmatprep.subr.bf16.mxu0 0
      %961 = vmatpush1.bf16.msra.mxu0 0
      %962 = vmatprep.subr.bf16.mxu0 0
      %963 = vmatpush1.bf16.msra.mxu0 0
      %964 = vmatprep.subr.bf16.mxu0 0
      %965 = vmatpush1.bf16.msra.mxu0 0
      %966 = vmatprep.subr.bf16.mxu0 0
      %967 = vmatpush1.bf16.msra.mxu0 0
      %968 = vmatprep.subr.bf16.mxu0 0
      %969 = vmatpush1.bf16.msra.mxu0 0
      %970 = vmatprep.subr.bf16.mxu0 0
      %971 = vmatpush1.bf16.msra.mxu0 0
      %972 = vmatprep.subr.bf16.mxu0 0
      %973 = vmatpush1.bf16.msra.mxu0 0
      %974 = vmatprep.subr.bf16.mxu0 0
      %975 = vmatpush1.bf16.msra.mxu0 0
      %976 = vmatprep.subr.bf16.mxu0 0
      %977 = vmatpush1.bf16.msra.mxu0 0
      %978 = vmatprep.mubr.bf16.mxu0 0
      %979 = vmatmul.mubr.bf16.gmra.mrb[0].mxu0 %v935
      %v980 = vpop.f32.mrb[0].mxu0
      %v981 = vadd.f32 0.0, %v980
      %v982 = vpop.f32.mrb[0].mxu0
      %v983 = vadd.f32 0.0, %v982
      %v984 = vpop.f32.mrb[0].mxu0
      %v985 = vadd.f32 0.0, %v984
      %v986 = vpop.f32.mrb[0].mxu0
      %v987 = vadd.f32 0.0, %v986
      %988 = vdwg.mxu0
      %989 = vmatprep.subr.bf16.mxu0 0
      %990 = vmatpush1.bf16.msra.mxu0 %v944
      %991 = vmatprep.subr.bf16.mxu0 0
      %992 = vmatpush1.bf16.msra.mxu0 0
      %993 = vmatprep.subr.bf16.mxu0 0
      %994 = vmatpush1.bf16.msra.mxu0 0
      %995 = vmatprep.subr.bf16.mxu0 0
      %996 = vmatpush1.bf16.msra.mxu0 0
      %997 = vmatprep.subr.bf16.mxu0 0
      %998 = vmatpush1.bf16.msra.mxu0 0
      %999 = vmatprep.subr.bf16.mxu0 0
      %1000 = vmatpush1.bf16.msra.mxu0 0
      %1001 = vmatprep.subr.bf16.mxu0 0
      %1002 = vmatpush1.bf16.msra.mxu0 0
      %1003 = vmatprep.subr.bf16.mxu0 0
      %1004 = vmatpush1.bf16.msra.mxu0 0
      %1005 = vmatprep.subr.bf16.mxu0 0
      %1006 = vmatpush1.bf16.msra.mxu0 0
      %1007 = vmatprep.subr.bf16.mxu0 0
      %1008 = vmatpush1.bf16.msra.mxu0 0
      %1009 = vmatprep.subr.bf16.mxu0 0
      %1010 = vmatpush1.bf16.msra.mxu0 0
      %1011 = vmatprep.subr.bf16.mxu0 0
      %1012 = vmatpush1.bf16.msra.mxu0 0
      %1013 = vmatprep.subr.bf16.mxu0 0
      %1014 = vmatpush1.bf16.msra.mxu0 0
      %1015 = vmatprep.subr.bf16.mxu0 0
      %1016 = vmatpush1.bf16.msra.mxu0 0
      %1017 = vmatprep.subr.bf16.mxu0 0
      %1018 = vmatpush1.bf16.msra.mxu0 0
      %1019 = vmatprep.subr.bf16.mxu0 0
      %1020 = vmatpush1.bf16.msra.mxu0 0
      %1021 = vmatprep.mubr.bf16.mxu0 0
      %1022 = vmatmul.mubr.bf16.gmra.mrb[0].mxu0 %v935
      %v1023 = vpop.f32.mrb[0].mxu0
      %v1024 = vadd.f32 0.0, %v1023
      %v1025 = vpop.f32.mrb[0].mxu0
      %v1026 = vpop.f32.mrb[0].mxu0
      %v1027 = vadd.f32 0.0, %v1026
      %v1028 = vpop.f32.mrb[0].mxu0
      %1029 = vdwg.mxu0
      %v1030 = vadd.f32 %v893, %v981
      %v1031 = vadd.f32 %v894, %v983
      %v1032 = vadd.f32 %v895, %v1024
      %v1033 = vadd.f32 %v896, %v985
      %v1034 = vadd.f32 %v897, %v987
      %v1035 = vadd.f32 %v898, %v1027
      %v1036 = vld [vmem:[%s244] sm:$0x3f]
      %s1037 = scalar_lea.vmem %s1, 48
      %v1038 = vld [vmem:[%s1037] sm:$0xf]
      %v1039 = vld [vmem:[%s1037 + $0x4] sm:$0xf]
      %v1042 = vunpack.c.l.b16 %v1038
      %v1043 = vunpack.c.l.b16 %v1039
      %v1044 = vpack.c.b16 %v1043, %v1042
      %v1046 = vcombine.high %v1036, %v1036
      %v1048 = vunpack.c.l.s4 1983009808
      %v1049 = vunpack.c.0.s8 %v1048
      %v1050 = vlaneseq
      %v1051 = vshrl.u32 %v1050, 7
      %v1052 = vsub.s32 %v1049, %v1051
      %v1053 = vrot.slane %v1036, %v1052
      %v1055 = vunpack.c.l.s4 1983009808
      %v1056 = vunpack.c.0.s8 %v1055
      %v1057 = vlaneseq
      %v1058 = vshrl.u32 %v1057, 7
      %v1059 = vsub.s32 %v1056, %v1058
      %v1060 = vrot.slane %v1046, %v1059
      %v1061 = vcombine.high %v1053, %v1053
      %1062 = vrot.lane.b32.xlu0 %v1053, 92
      %v1063 = vpop.permute.xlu0 %1062
      %1064 = vrot.lane.b32.xlu0 %v1061, 92
      %v1065 = vpop.permute.xlu0 %1064
      %1066 = vrot.lane.b32.xlu0 %v1060, 92
      %v1067 = vpop.permute.xlu0 %1066
      %vm1068 = vcmask 752640
      %v1069 = vsel %vm1068, %v1063, %v1065
      %v1070 = vsel %vm1068, %v1065, %v1067
      %v1072 = vsel %vm286, %v1044, 0
      %v1075 = vand.u32 %v1069, %v293
      %v1078 = vand.u32 %v1070, %v293
      %v1081 = vand.u32 %v1067, %v293
      %1083 = vmatprep.subr.bf16.mxu0 %v1078
      %1084 = vmatpush1.bf16.msra.mxu0 %v1075
      %1085 = vmatprep.subr.bf16.mxu0 0
      %1086 = vmatpush1.bf16.msra.mxu0 0
      %1087 = vmatprep.subr.bf16.mxu0 0
      %1088 = vmatpush1.bf16.msra.mxu0 0
      %1089 = vmatprep.subr.bf16.mxu0 0
      %1090 = vmatpush1.bf16.msra.mxu0 0
      %1091 = vmatprep.subr.bf16.mxu0 0
      %1092 = vmatpush1.bf16.msra.mxu0 0
      %1093 = vmatprep.subr.bf16.mxu0 0
      %1094 = vmatpush1.bf16.msra.mxu0 0
      %1095 = vmatprep.subr.bf16.mxu0 0
      %1096 = vmatpush1.bf16.msra.mxu0 0
      %1097 = vmatprep.subr.bf16.mxu0 0
      %1098 = vmatpush1.bf16.msra.mxu0 0
      %1099 = vmatprep.subr.bf16.mxu0 0
      %1100 = vmatpush1.bf16.msra.mxu0 0
      %1101 = vmatprep.subr.bf16.mxu0 0
      %1102 = vmatpush1.bf16.msra.mxu0 0
      %1103 = vmatprep.subr.bf16.mxu0 0
      %1104 = vmatpush1.bf16.msra.mxu0 0
      %1105 = vmatprep.subr.bf16.mxu0 0
      %1106 = vmatpush1.bf16.msra.mxu0 0
      %1107 = vmatprep.subr.bf16.mxu0 0
      %1108 = vmatpush1.bf16.msra.mxu0 0
      %1109 = vmatprep.subr.bf16.mxu0 0
      %1110 = vmatpush1.bf16.msra.mxu0 0
      %1111 = vmatprep.subr.bf16.mxu0 0
      %1112 = vmatpush1.bf16.msra.mxu0 0
      %1113 = vmatprep.subr.bf16.mxu0 0
      %1114 = vmatpush1.bf16.msra.mxu0 0
      %1115 = vmatprep.mubr.bf16.mxu0 0
      %1116 = vmatmul.mubr.bf16.gmra.mrb[0].mxu0 %v1072
      %v1117 = vpop.f32.mrb[0].mxu0
      %v1118 = vadd.f32 0.0, %v1117
      %v1119 = vpop.f32.mrb[0].mxu0
      %v1120 = vadd.f32 0.0, %v1119
      %v1121 = vpop.f32.mrb[0].mxu0
      %v1122 = vadd.f32 0.0, %v1121
      %v1123 = vpop.f32.mrb[0].mxu0
      %v1124 = vadd.f32 0.0, %v1123
      %1125 = vdwg.mxu0
      %1126 = vmatprep.subr.bf16.mxu0 0
      %1127 = vmatpush1.bf16.msra.mxu0 %v1081
      %1128 = vmatprep.subr.bf16.mxu0 0
      %1129 = vmatpush1.bf16.msra.mxu0 0
      %1130 = vmatprep.subr.bf16.mxu0 0
      %1131 = vmatpush1.bf16.msra.mxu0 0
      %1132 = vmatprep.subr.bf16.mxu0 0
      %1133 = vmatpush1.bf16.msra.mxu0 0
      %1134 = vmatprep.subr.bf16.mxu0 0
      %1135 = vmatpush1.bf16.msra.mxu0 0
      %1136 = vmatprep.subr.bf16.mxu0 0
      %1137 = vmatpush1.bf16.msra.mxu0 0
      %1138 = vmatprep.subr.bf16.mxu0 0
      %1139 = vmatpush1.bf16.msra.mxu0 0
      %1140 = vmatprep.subr.bf16.mxu0 0
      %1141 = vmatpush1.bf16.msra.mxu0 0
      %1142 = vmatprep.subr.bf16.mxu0 0
      %1143 = vmatpush1.bf16.msra.mxu0 0
      %1144 = vmatprep.subr.bf16.mxu0 0
      %1145 = vmatpush1.bf16.msra.mxu0 0
      %1146 = vmatprep.subr.bf16.mxu0 0
      %1147 = vmatpush1.bf16.msra.mxu0 0
      %1148 = vmatprep.subr.bf16.mxu0 0
      %1149 = vmatpush1.bf16.msra.mxu0 0
      %1150 = vmatprep.subr.bf16.mxu0 0
      %1151 = vmatpush1.bf16.msra.mxu0 0
      %1152 = vmatprep.subr.bf16.mxu0 0
      %1153 = vmatpush1.bf16.msra.mxu0 0
      %1154 = vmatprep.subr.bf16.mxu0 0
      %1155 = vmatpush1.bf16.msra.mxu0 0
      %1156 = vmatprep.subr.bf16.mxu0 0
      %1157 = vmatpush1.bf16.msra.mxu0 0
      %1158 = vmatprep.mubr.bf16.mxu0 0
      %1159 = vmatmul.mubr.bf16.gmra.mrb[0].mxu0 %v1072
      %v1160 = vpop.f32.mrb[0].mxu0
      %v1161 = vadd.f32 0.0, %v1160
      %v1162 = vpop.f32.mrb[0].mxu0
      %v1163 = vpop.f32.mrb[0].mxu0
      %v1164 = vadd.f32 0.0, %v1163
      %v1165 = vpop.f32.mrb[0].mxu0
      %1166 = vdwg.mxu0
      %v1167 = vadd.f32 %v1030, %v1118
      %v1168 = vadd.f32 %v1031, %v1120
      %v1169 = vadd.f32 %v1032, %v1161
      %v1170 = vadd.f32 %v1033, %v1122
      %v1171 = vadd.f32 %v1034, %v1124
      %v1172 = vadd.f32 %v1035, %v1164
      %v1173 = vld [vmem:[%s244] sm:$0x3f]
      %s1174 = scalar_lea.vmem %s1, 56
      %v1175 = vld [vmem:[%s1174] sm:$0xf]
      %v1176 = vld [vmem:[%s1174 + $0x4] sm:$0xf]
      %v1179 = vunpack.c.l.b16 %v1175
      %v1180 = vunpack.c.l.b16 %v1176
      %v1181 = vpack.c.b16 %v1180, %v1179
      %v1183 = vcombine.high %v1173, %v1173
      %v1185 = vunpack.c.l.s4 1983009808
      %v1186 = vunpack.c.0.s8 %v1185
      %v1187 = vlaneseq
      %v1188 = vshrl.u32 %v1187, 7
      %v1189 = vsub.s32 %v1186, %v1188
      %v1190 = vrot.slane %v1173, %v1189
      %v1192 = vunpack.c.l.s4 1983009808
      %v1193 = vunpack.c.0.s8 %v1192
      %v1194 = vlaneseq
      %v1195 = vshrl.u32 %v1194, 7
      %v1196 = vsub.s32 %v1193, %v1195
      %v1197 = vrot.slane %v1183, %v1196
      %v1198 = vcombine.high %v1190, %v1190
      %1199 = vrot.lane.b32.xlu0 %v1190, 91
      %v1200 = vpop.permute.xlu0 %1199
      %1201 = vrot.lane.b32.xlu0 %v1198, 91
      %v1202 = vpop.permute.xlu0 %1201
      %1203 = vrot.lane.b32.xlu0 %v1197, 91
      %v1204 = vpop.permute.xlu0 %1203
      %vm1205 = vcmask 744448
      %v1206 = vsel %vm1205, %v1200, %v1202
      %v1207 = vsel %vm1205, %v1202, %v1204
      %v1209 = vsel %vm286, %v1181, 0
      %v1212 = vand.u32 %v1206, %v293
      %v1215 = vand.u32 %v1207, %v293
      %v1218 = vand.u32 %v1204, %v293
      %1220 = vmatprep.subr.bf16.mxu0 %v1215
      %1221 = vmatpush1.bf16.msra.mxu0 %v1212
      %1222 = vmatprep.subr.bf16.mxu0 0
      %1223 = vmatpush1.bf16.msra.mxu0 0
      %1224 = vmatprep.subr.bf16.mxu0 0
      %1225 = vmatpush1.bf16.msra.mxu0 0
      %1226 = vmatprep.subr.bf16.mxu0 0
      %1227 = vmatpush1.bf16.msra.mxu0 0
      %1228 = vmatprep.subr.bf16.mxu0 0
      %1229 = vmatpush1.bf16.msra.mxu0 0
      %1230 = vmatprep.subr.bf16.mxu0 0
      %1231 = vmatpush1.bf16.msra.mxu0 0
      %1232 = vmatprep.subr.bf16.mxu0 0
      %1233 = vmatpush1.bf16.msra.mxu0 0
      %1234 = vmatprep.subr.bf16.mxu0 0
      %1235 = vmatpush1.bf16.msra.mxu0 0
      %1236 = vmatprep.subr.bf16.mxu0 0
      %1237 = vmatpush1.bf16.msra.mxu0 0
      %1238 = vmatprep.subr.bf16.mxu0 0
      %1239 = vmatpush1.bf16.msra.mxu0 0
      %1240 = vmatprep.subr.bf16.mxu0 0
      %1241 = vmatpush1.bf16.msra.mxu0 0
      %1242 = vmatprep.subr.bf16.mxu0 0
      %1243 = vmatpush1.bf16.msra.mxu0 0
      %1244 = vmatprep.subr.bf16.mxu0 0
      %1245 = vmatpush1.bf16.msra.mxu0 0
      %1246 = vmatprep.subr.bf16.mxu0 0
      %1247 = vmatpush1.bf16.msra.mxu0 0
      %1248 = vmatprep.subr.bf16.mxu0 0
      %1249 = vmatpush1.bf16.msra.mxu0 0
      %1250 = vmatprep.subr.bf16.mxu0 0
      %1251 = vmatpush1.bf16.msra.mxu0 0
      %1252 = vmatprep.mubr.bf16.mxu0 0
      %1253 = vmatmul.mubr.bf16.gmra.mrb[0].mxu0 %v1209
      %v1254 = vpop.f32.mrb[0].mxu0
      %v1255 = vadd.f32 0.0, %v1254
      %v1256 = vpop.f32.mrb[0].mxu0
      %v1257 = vadd.f32 0.0, %v1256
      %v1258 = vpop.f32.mrb[0].mxu0
      %v1259 = vadd.f32 0.0, %v1258
      %v1260 = vpop.f32.mrb[0].mxu0
      %v1261 = vadd.f32 0.0, %v1260
      %1262 = vdwg.mxu0
      %1263 = vmatprep.subr.bf16.mxu0 0
      %1264 = vmatpush1.bf16.msra.mxu0 %v1218
      %1265 = vmatprep.subr.bf16.mxu0 0
      %1266 = vmatpush1.bf16.msra.mxu0 0
      %1267 = vmatprep.subr.bf16.mxu0 0
      %1268 = vmatpush1.bf16.msra.mxu0 0
      %1269 = vmatprep.subr.bf16.mxu0 0
      %1270 = vmatpush1.bf16.msra.mxu0 0
      %1271 = vmatprep.subr.bf16.mxu0 0
      %1272 = vmatpush1.bf16.msra.mxu0 0
      %1273 = vmatprep.subr.bf16.mxu0 0
      %1274 = vmatpush1.bf16.msra.mxu0 0
      %1275 = vmatprep.subr.bf16.mxu0 0
      %1276 = vmatpush1.bf16.msra.mxu0 0
      %1277 = vmatprep.subr.bf16.mxu0 0
      %1278 = vmatpush1.bf16.msra.mxu0 0
      %1279 = vmatprep.subr.bf16.mxu0 0
      %1280 = vmatpush1.bf16.msra.mxu0 0
      %1281 = vmatprep.subr.bf16.mxu0 0
      %1282 = vmatpush1.bf16.msra.mxu0 0
      %1283 = vmatprep.subr.bf16.mxu0 0
      %1284 = vmatpush1.bf16.msra.mxu0 0
      %1285 = vmatprep.subr.bf16.mxu0 0
      %1286 = vmatpush1.bf16.msra.mxu0 0
      %1287 = vmatprep.subr.bf16.mxu0 0
      %1288 = vmatpush1.bf16.msra.mxu0 0
      %1289 = vmatprep.subr.bf16.mxu0 0
      %1290 = vmatpush1.bf16.msra.mxu0 0
      %1291 = vmatprep.subr.bf16.mxu0 0
      %1292 = vmatpush1.bf16.msra.mxu0 0
      %1293 = vmatprep.subr.bf16.mxu0 0
      %1294 = vmatpush1.bf16.msra.mxu0 0
      %1295 = vmatprep.mubr.bf16.mxu0 0
      %1296 = vmatmul.mubr.bf16.gmra.mrb[0].mxu0 %v1209
      %v1297 = vpop.f32.mrb[0].mxu0
      %v1298 = vadd.f32 0.0, %v1297
      %v1299 = vpop.f32.mrb[0].mxu0
      %v1300 = vpop.f32.mrb[0].mxu0
      %v1301 = vadd.f32 0.0, %v1300
      %v1302 = vpop.f32.mrb[0].mxu0
      %1303 = vdwg.mxu0
      %v1304 = vadd.f32 %v1167, %v1255
      %v1305 = vadd.f32 %v1168, %v1257
      %v1306 = vadd.f32 %v1169, %v1298
      %v1307 = vadd.f32 %v1170, %v1259
      %v1308 = vadd.f32 %v1171, %v1261
      %v1309 = vadd.f32 %v1172, %v1301
      %v1310 = vld [vmem:[%s244] sm:$0x3f]
      %s1311 = scalar_lea.vmem %s1, 64
      %v1312 = vld [vmem:[%s1311] sm:$0xf]
      %v1313 = vld [vmem:[%s1311 + $0x4] sm:$0xf]
      %v1316 = vunpack.c.l.b16 %v1312
      %v1317 = vunpack.c.l.b16 %v1313
      %v1318 = vpack.c.b16 %v1317, %v1316
      %v1320 = vcombine.high %v1310, %v1310
      %v1322 = vunpack.c.l.s4 1983009808
      %v1323 = vunpack.c.0.s8 %v1322
      %v1324 = vlaneseq
      %v1325 = vshrl.u32 %v1324, 7
      %v1326 = vsub.s32 %v1323, %v1325
      %v1327 = vrot.slane %v1310, %v1326
      %v1329 = vunpack.c.l.s4 1983009808
      %v1330 = vunpack.c.0.s8 %v1329
      %v1331 = vlaneseq
      %v1332 = vshrl.u32 %v1331, 7
      %v1333 = vsub.s32 %v1330, %v1332
      %v1334 = vrot.slane %v1320, %v1333
      %v1335 = vcombine.high %v1327, %v1327
      %1336 = vrot.lane.b32.xlu0 %v1327, 90
      %v1337 = vpop.permute.xlu0 %1336
      %1338 = vrot.lane.b32.xlu0 %v1335, 90
      %v1339 = vpop.permute.xlu0 %1338
      %1340 = vrot.lane.b32.xlu0 %v1334, 90
      %v1341 = vpop.permute.xlu0 %1340
      %vm1342 = vcmask 736256
      %v1343 = vsel %vm1342, %v1337, %v1339
      %v1344 = vsel %vm1342, %v1339, %v1341
      %v1346 = vsel %vm286, %v1318, 0
      %v1349 = vand.u32 %v1343, %v293
      %v1352 = vand.u32 %v1344, %v293
      %v1355 = vand.u32 %v1341, %v293
      %1357 = vmatprep.subr.bf16.mxu0 %v1352
      %1358 = vmatpush1.bf16.msra.mxu0 %v1349
      %1359 = vmatprep.subr.bf16.mxu0 0
      %1360 = vmatpush1.bf16.msra.mxu0 0
      %1361 = vmatprep.subr.bf16.mxu0 0
      %1362 = vmatpush1.bf16.msra.mxu0 0
      %1363 = vmatprep.subr.bf16.mxu0 0
      %1364 = vmatpush1.bf16.msra.mxu0 0
      %1365 = vmatprep.subr.bf16.mxu0 0
      %1366 = vmatpush1.bf16.msra.mxu0 0
      %1367 = vmatprep.subr.bf16.mxu0 0
      %1368 = vmatpush1.bf16.msra.mxu0 0
      %1369 = vmatprep.subr.bf16.mxu0 0
      %1370 = vmatpush1.bf16.msra.mxu0 0
      %1371 = vmatprep.subr.bf16.mxu0 0
      %1372 = vmatpush1.bf16.msra.mxu0 0
      %1373 = vmatprep.subr.bf16.mxu0 0
      %1374 = vmatpush1.bf16.msra.mxu0 0
      %1375 = vmatprep.subr.bf16.mxu0 0
      %1376 = vmatpush1.bf16.msra.mxu0 0
      %1377 = vmatprep.subr.bf16.mxu0 0
      %1378 = vmatpush1.bf16.msra.mxu0 0
      %1379 = vmatprep.subr.bf16.mxu0 0
      %1380 = vmatpush1.bf16.msra.mxu0 0
      %1381 = vmatprep.subr.bf16.mxu0 0
      %1382 = vmatpush1.bf16.msra.mxu0 0
      %1383 = vmatprep.subr.bf16.mxu0 0
      %1384 = vmatpush1.bf16.msra.mxu0 0
      %1385 = vmatprep.subr.bf16.mxu0 0
      %1386 = vmatpush1.bf16.msra.mxu0 0
      %1387 = vmatprep.subr.bf16.mxu0 0
      %1388 = vmatpush1.bf16.msra.mxu0 0
      %1389 = vmatprep.mubr.bf16.mxu0 0
      %1390 = vmatmul.mubr.bf16.gmra.mrb[0].mxu0 %v1346
      %v1391 = vpop.f32.mrb[0].mxu0
      %v1392 = vadd.f32 0.0, %v1391
      %v1393 = vpop.f32.mrb[0].mxu0
      %v1394 = vadd.f32 0.0, %v1393
      %v1395 = vpop.f32.mrb[0].mxu0
      %v1396 = vadd.f32 0.0, %v1395
      %v1397 = vpop.f32.mrb[0].mxu0
      %v1398 = vadd.f32 0.0, %v1397
      %1399 = vdwg.mxu0
      %1400 = vmatprep.subr.bf16.mxu0 0
      %1401 = vmatpush1.bf16.msra.mxu0 %v1355
      %1402 = vmatprep.subr.bf16.mxu0 0
      %1403 = vmatpush1.bf16.msra.mxu0 0
      %1404 = vmatprep.subr.bf16.mxu0 0
      %1405 = vmatpush1.bf16.msra.mxu0 0
      %1406 = vmatprep.subr.bf16.mxu0 0
      %1407 = vmatpush1.bf16.msra.mxu0 0
      %1408 = vmatprep.subr.bf16.mxu0 0
      %1409 = vmatpush1.bf16.msra.mxu0 0
      %1410 = vmatprep.subr.bf16.mxu0 0
      %1411 = vmatpush1.bf16.msra.mxu0 0
      %1412 = vmatprep.subr.bf16.mxu0 0
      %1413 = vmatpush1.bf16.msra.mxu0 0
      %1414 = vmatprep.subr.bf16.mxu0 0
      %1415 = vmatpush1.bf16.msra.mxu0 0
      %1416 = vmatprep.subr.bf16.mxu0 0
      %1417 = vmatpush1.bf16.msra.mxu0 0
      %1418 = vmatprep.subr.bf16.mxu0 0
      %1419 = vmatpush1.bf16.msra.mxu0 0
      %1420 = vmatprep.subr.bf16.mxu0 0
      %1421 = vmatpush1.bf16.msra.mxu0 0
      %1422 = vmatprep.subr.bf16.mxu0 0
      %1423 = vmatpush1.bf16.msra.mxu0 0
      %1424 = vmatprep.subr.bf16.mxu0 0
      %1425 = vmatpush1.bf16.msra.mxu0 0
      %1426 = vmatprep.subr.bf16.mxu0 0
      %1427 = vmatpush1.bf16.msra.mxu0 0
      %1428 = vmatprep.subr.bf16.mxu0 0
      %1429 = vmatpush1.bf16.msra.mxu0 0
      %1430 = vmatprep.subr.bf16.mxu0 0
      %1431 = vmatpush1.bf16.msra.mxu0 0
      %1432 = vmatprep.mubr.bf16.mxu0 0
      %1433 = vmatmul.mubr.bf16.gmra.mrb[0].mxu0 %v1346
      %v1434 = vpop.f32.mrb[0].mxu0
      %v1435 = vadd.f32 0.0, %v1434
      %v1436 = vpop.f32.mrb[0].mxu0
      %v1437 = vpop.f32.mrb[0].mxu0
      %v1438 = vadd.f32 0.0, %v1437
      %v1439 = vpop.f32.mrb[0].mxu0
      %1440 = vdwg.mxu0
      %v1441 = vadd.f32 %v1304, %v1392
      %v1442 = vadd.f32 %v1305, %v1394
      %v1443 = vadd.f32 %v1306, %v1435
      %v1444 = vadd.f32 %v1307, %v1396
      %v1445 = vadd.f32 %v1308, %v1398
      %v1446 = vadd.f32 %v1309, %v1438
      %v1447 = vld [vmem:[%s2] sm:$0xff]
      %v1448 = vld [vmem:[%s2 + $0x8] sm:$0xff]
      %1450 = vset.pattern.permute.xlu0 0
      %1451 = vperm.xlu0 %1450, %v1447
      %v1452 = vpop.permute.xlu0 %1451
      %1455 = vset.pattern.permute.xlu0 0
      %1456 = vperm.xlu0 %1455, %v1448
      %v1457 = vpop.permute.xlu0 %1456
      %v1459 = vadd.f32 %v1441, %v1452
      %v1460 = vadd.f32 %v1442, %v1452
      %v1461 = vadd.f32 %v1443, %v1452
      %v1462 = vadd.f32 %v1444, %v1457
      %v1463 = vadd.f32 %v1445, %v1457
      %v1464 = vadd.f32 %v1446, %v1457
      %v1465 = vmax.f32 %v1459, 0.0
      %v1466 = vmax.f32 %v1460, 0.0
      %v1467 = vmax.f32 %v1461, 0.0
      %v1468 = vmax.f32 %v1462, 0.0
      %v1469 = vmax.f32 %v1463, 0.0
      %v1470 = vmax.f32 %v1464, 0.0
      %v1471 = vld [vmem:[%s5] sm:$0x7]
      %v1473 = vlaneseq
      %v1474 = vshrl.u32 %v1473, 7
      %v1475 = vsub.s32 0, %v1474
      %v1476 = vrot.slane %v1471, %v1475
      %v1477 = vlaneseq
      %v1478 = vshrl.u32 %v1477, 7
      %v1479 = vsub.s32 1, %v1478
      %v1480 = vrot.slane %v1471, %v1479
      %v1481 = vlaneseq
      %v1482 = vshrl.u32 %v1481, 7
      %v1483 = vsub.s32 2, %v1482
      %v1484 = vrot.slane %v1471, %v1483
      %vm1487 = vcmask 244736
      %v1488 = vsel %vm1487, %v1484, 0
      %v1491 = vsel %vm1487, %v1467, 0
      %v1494 = vsel %vm1487, %v1470, 0
      %1496 = vmatprep.subr.mxu0 %v1466
      %1497 = vmatpush1.xpose.msra.mxu0 %v1465
      %1498 = vmatprep.subr.mxu0 %v1469
      %1499 = vmatpush1.xpose.msra.mxu0 %v1468
      %1500 = vmatprep.subr.mxu0 0.0
      %1501 = vmatpush1.xpose.msra.mxu0 0.0
      %1502 = vmatprep.subr.mxu0 0.0
      %1503 = vmatpush1.xpose.msra.mxu0 0.0
      %1504 = vmatprep.subr.mxu0 0.0
      %1505 = vmatpush1.xpose.msra.mxu0 0.0
      %1506 = vmatprep.subr.mxu0 0.0
      %1507 = vmatpush1.xpose.msra.mxu0 0.0
      %1508 = vmatprep.subr.mxu0 0.0
      %1509 = vmatpush1.xpose.msra.mxu0 0.0
      %1510 = vmatprep.subr.mxu0 0.0
      %1511 = vmatpush1.xpose.msra.mxu0 0.0
      %1512 = vmatprep.subr.mxu0 0.0
      %1513 = vmatpush1.xpose.msra.mxu0 0.0
      %1514 = vmatprep.subr.mxu0 0.0
      %1515 = vmatpush1.xpose.msra.mxu0 0.0
      %1516 = vmatprep.subr.mxu0 0.0
      %1517 = vmatpush1.xpose.msra.mxu0 0.0
      %1518 = vmatprep.subr.mxu0 0.0
      %1519 = vmatpush1.xpose.msra.mxu0 0.0
      %1520 = vmatprep.subr.mxu0 0.0
      %1521 = vmatpush1.xpose.msra.mxu0 0.0
      %1522 = vmatprep.subr.mxu0 0.0
      %1523 = vmatpush1.xpose.msra.mxu0 0.0
      %1524 = vmatprep.subr.mxu0 0.0
      %1525 = vmatpush1.xpose.msra.mxu0 0.0
      %1526 = vmatprep.subr.mxu0 0.0
      %1527 = vmatpush1.xpose.msra.mxu0 0.0
      %1528 = vmatprep.subr.mxu0 0.0
      %1529 = vmatpush1.xpose.msra.mxu0 0.0
      %1530 = vmatprep.subr.mxu0 0.0
      %1531 = vmatpush1.xpose.msra.mxu0 0.0
      %1532 = vmatprep.subr.mxu0 0.0
      %1533 = vmatpush1.xpose.msra.mxu0 0.0
      %1534 = vmatprep.subr.mxu0 0.0
      %1535 = vmatpush1.xpose.msra.mxu0 0.0
      %1536 = vmatprep.subr.mxu0 0.0
      %1537 = vmatpush1.xpose.msra.mxu0 0.0
      %1538 = vmatprep.subr.mxu0 0.0
      %1539 = vmatpush1.xpose.msra.mxu0 0.0
      %1540 = vmatprep.subr.mxu0 0.0
      %1541 = vmatpush1.xpose.msra.mxu0 0.0
      %1542 = vmatprep.subr.mxu0 0.0
      %1543 = vmatpush1.xpose.msra.mxu0 0.0
      %1544 = vmatprep.subr.mxu0 0.0
      %1545 = vmatpush1.xpose.msra.mxu0 0.0
      %1546 = vmatprep.subr.mxu0 0.0
      %1547 = vmatpush1.xpose.msra.mxu0 0.0
      %1548 = vmatprep.subr.mxu0 0.0
      %1549 = vmatpush1.xpose.msra.mxu0 0.0
      %1550 = vmatprep.subr.mxu0 0.0
      %1551 = vmatpush1.xpose.msra.mxu0 0.0
      %1552 = vmatprep.subr.mxu0 0.0
      %1553 = vmatpush1.xpose.msra.mxu0 0.0
      %1554 = vmatprep.subr.mxu0 0.0
      %1555 = vmatpush1.xpose.msra.mxu0 0.0
      %1556 = vmatprep.subr.mxu0 0.0
      %1557 = vmatpush1.xpose.msra.mxu0 0.0
      %1558 = vmatprep.subr.mxu0 0.0
      %1559 = vmatpush1.xpose.msra.mxu0 0.0
      %1560 = vmatprep.mubr.f32.mxu0 %v1480
      %1561 = vmatmul.mubr.f32.gmra.mrb[0].mxu0 %v1476
      %v1562 = vpop.f32.mrb[0].mxu0
      %v1563 = vadd.f32 0.0, %v1562
      %v1564 = vpop.f32.mrb[0].mxu0
      %1565 = vdwg.mxu0
      %1566 = vmatprep.subr.mxu0 0.0
      %1567 = vmatpush1.xpose.msra.mxu0 %v1491
      %1568 = vmatprep.subr.mxu0 0.0
      %1569 = vmatpush1.xpose.msra.mxu0 %v1494
      %1570 = vmatprep.subr.mxu0 0.0
      %1571 = vmatpush1.xpose.msra.mxu0 0.0
      %1572 = vmatprep.subr.mxu0 0.0
      %1573 = vmatpush1.xpose.msra.mxu0 0.0
      %1574 = vmatprep.subr.mxu0 0.0
      %1575 = vmatpush1.xpose.msra.mxu0 0.0
      %1576 = vmatprep.subr.mxu0 0.0
      %1577 = vmatpush1.xpose.msra.mxu0 0.0
      %1578 = vmatprep.subr.mxu0 0.0
      %1579 = vmatpush1.xpose.msra.mxu0 0.0
      %1580 = vmatprep.subr.mxu0 0.0
      %1581 = vmatpush1.xpose.msra.mxu0 0.0
      %1582 = vmatprep.subr.mxu0 0.0
      %1583 = vmatpush1.xpose.msra.mxu0 0.0
      %1584 = vmatprep.subr.mxu0 0.0
      %1585 = vmatpush1.xpose.msra.mxu0 0.0
      %1586 = vmatprep.subr.mxu0 0.0
      %1587 = vmatpush1.xpose.msra.mxu0 0.0
      %1588 = vmatprep.subr.mxu0 0.0
      %1589 = vmatpush1.xpose.msra.mxu0 0.0
      %1590 = vmatprep.subr.mxu0 0.0
      %1591 = vmatpush1.xpose.msra.mxu0 0.0
      %1592 = vmatprep.subr.mxu0 0.0
      %1593 = vmatpush1.xpose.msra.mxu0 0.0
      %1594 = vmatprep.subr.mxu0 0.0
      %1595 = vmatpush1.xpose.msra.mxu0 0.0
      %1596 = vmatprep.subr.mxu0 0.0
      %1597 = vmatpush1.xpose.msra.mxu0 0.0
      %1598 = vmatprep.subr.mxu0 0.0
      %1599 = vmatpush1.xpose.msra.mxu0 0.0
      %1600 = vmatprep.subr.mxu0 0.0
      %1601 = vmatpush1.xpose.msra.mxu0 0.0
      %1602 = vmatprep.subr.mxu0 0.0
      %1603 = vmatpush1.xpose.msra.mxu0 0.0
      %1604 = vmatprep.subr.mxu0 0.0
      %1605 = vmatpush1.xpose.msra.mxu0 0.0
      %1606 = vmatprep.subr.mxu0 0.0
      %1607 = vmatpush1.xpose.msra.mxu0 0.0
      %1608 = vmatprep.subr.mxu0 0.0
      %1609 = vmatpush1.xpose.msra.mxu0 0.0
      %1610 = vmatprep.subr.mxu0 0.0
      %1611 = vmatpush1.xpose.msra.mxu0 0.0
      %1612 = vmatprep.subr.mxu0 0.0
      %1613 = vmatpush1.xpose.msra.mxu0 0.0
      %1614 = vmatprep.subr.mxu0 0.0
      %1615 = vmatpush1.xpose.msra.mxu0 0.0
      %1616 = vmatprep.subr.mxu0 0.0
      %1617 = vmatpush1.xpose.msra.mxu0 0.0
      %1618 = vmatprep.subr.mxu0 0.0
      %1619 = vmatpush1.xpose.msra.mxu0 0.0
      %1620 = vmatprep.subr.mxu0 0.0
      %1621 = vmatpush1.xpose.msra.mxu0 0.0
      %1622 = vmatprep.subr.mxu0 0.0
      %1623 = vmatpush1.xpose.msra.mxu0 0.0
      %1624 = vmatprep.subr.mxu0 0.0
      %1625 = vmatpush1.xpose.msra.mxu0 0.0
      %1626 = vmatprep.subr.mxu0 0.0
      %1627 = vmatpush1.xpose.msra.mxu0 0.0
      %1628 = vmatprep.subr.mxu0 0.0
      %1629 = vmatpush1.xpose.msra.mxu0 0.0
      %1630 = vmatprep.mubr.f32.mxu0 0.0
      %1631 = vmatmul.mubr.f32.gmra.mrb[0].mxu0 %v1488
      %v1632 = vpop.f32.mrb[0].mxu0
      %v1633 = vadd.f32 %v1563, %v1632
      %v1634 = vpop.f32.mrb[0].mxu0
      %1635 = vdwg.mxu0
      %v1636 = vld [vmem:[%s3] sm:$0xff]
      %v1637 = vld [vmem:[%s3 + $0x8] sm:$0xff]
      %v1638 = vld [vmem:[%s4] sm:$0x1]
      %vm1639 = vcmask 130048
      %v1641 = vsel %vm1639, %v1633, 0
      %1643 = vmatprep.subr.mxu0 0.0
      %1644 = vmatpush1.msra.mxu0 %v1636
      %1645 = vmatprep.subr.mxu0 0.0
      %1646 = vmatpush1.msra.mxu0 %v1637
      %1647 = vmatprep.subr.mxu0 0.0
      %1648 = vmatpush1.msra.mxu0 0.0
      %1649 = vmatprep.subr.mxu0 0.0
      %1650 = vmatpush1.msra.mxu0 0.0
      %1651 = vmatprep.subr.mxu0 0.0
      %1652 = vmatpush1.msra.mxu0 0.0
      %1653 = vmatprep.subr.mxu0 0.0
      %1654 = vmatpush1.msra.mxu0 0.0
      %1655 = vmatprep.subr.mxu0 0.0
      %1656 = vmatpush1.msra.mxu0 0.0
      %1657 = vmatprep.subr.mxu0 0.0
      %1658 = vmatpush1.msra.mxu0 0.0
      %1659 = vmatprep.subr.mxu0 0.0
      %1660 = vmatpush1.msra.mxu0 0.0
      %1661 = vmatprep.subr.mxu0 0.0
      %1662 = vmatpush1.msra.mxu0 0.0
      %1663 = vmatprep.subr.mxu0 0.0
      %1664 = vmatpush1.msra.mxu0 0.0
      %1665 = vmatprep.subr.mxu0 0.0
      %1666 = vmatpush1.msra.mxu0 0.0
      %1667 = vmatprep.subr.mxu0 0.0
      %1668 = vmatpush1.msra.mxu0 0.0
      %1669 = vmatprep.subr.mxu0 0.0
      %1670 = vmatpush1.msra.mxu0 0.0
      %1671 = vmatprep.subr.mxu0 0.0
      %1672 = vmatpush1.msra.mxu0 0.0
      %1673 = vmatprep.subr.mxu0 0.0
      %1674 = vmatpush1.msra.mxu0 0.0
      %1675 = vmatprep.subr.mxu0 0.0
      %1676 = vmatpush1.msra.mxu0 0.0
      %1677 = vmatprep.subr.mxu0 0.0
      %1678 = vmatpush1.msra.mxu0 0.0
      %1679 = vmatprep.subr.mxu0 0.0
      %1680 = vmatpush1.msra.mxu0 0.0
      %1681 = vmatprep.subr.mxu0 0.0
      %1682 = vmatpush1.msra.mxu0 0.0
      %1683 = vmatprep.subr.mxu0 0.0
      %1684 = vmatpush1.msra.mxu0 0.0
      %1685 = vmatprep.subr.mxu0 0.0
      %1686 = vmatpush1.msra.mxu0 0.0
      %1687 = vmatprep.subr.mxu0 0.0
      %1688 = vmatpush1.msra.mxu0 0.0
      %1689 = vmatprep.subr.mxu0 0.0
      %1690 = vmatpush1.msra.mxu0 0.0
      %1691 = vmatprep.subr.mxu0 0.0
      %1692 = vmatpush1.msra.mxu0 0.0
      %1693 = vmatprep.subr.mxu0 0.0
      %1694 = vmatpush1.msra.mxu0 0.0
      %1695 = vmatprep.subr.mxu0 0.0
      %1696 = vmatpush1.msra.mxu0 0.0
      %1697 = vmatprep.subr.mxu0 0.0
      %1698 = vmatpush1.msra.mxu0 0.0
      %1699 = vmatprep.subr.mxu0 0.0
      %1700 = vmatpush1.msra.mxu0 0.0
      %1701 = vmatprep.subr.mxu0 0.0
      %1702 = vmatpush1.msra.mxu0 0.0
      %1703 = vmatprep.subr.mxu0 0.0
      %1704 = vmatpush1.msra.mxu0 0.0
      %1705 = vmatprep.subr.mxu0 0.0
      %1706 = vmatpush1.msra.mxu0 0.0
      %1707 = vmatprep.mubr.f32.mxu0 0.0
      %1708 = vmatmul.mubr.f32.gmra.mrb[0].mxu0 %v1641
      %v1709 = vpop.f32.mrb[0].mxu0
      %v1710 = vadd.f32 %v1638, %v1709
      %v1711 = vpop.f32.mrb[0].mxu0
      %1712 = vdwg.mxu0
      %vm1713 = vcmask 516096
      %1714 = vst.msk [vmem:[%s247] sm:$0x1] %vm1713, %v1710
      %p1715 = scmp.lt.s32.totalorder %s17, 3
      %s1716 = scalar_select %p1715, %s17, 3
      %s1717 = scalar_lea.vmem %s6, %s1716
      // Predicated region
      $region45: #{kinship_forward.1} parent=43 // pred_check
        %p1718 = pneg %p166
      $region46: #{kinship_forward.1} parent=43 // pred_check_branch
        %1720 = sbr.rel (%p1718) target = $region48
      $region47: #{kinship_forward.1} parent=43 // pred_region
        _
      $region48: #{kinship_forward.1} parent=43 // pred_fallthru
        _
    $region44: #{kinship_forward.1} parent=5 // pred_fallthru
      _
    %p1721 = scmp.le.s32.totalorder 2, %s12
    // Predicated region
    $region49: #{kinship_forward.1} parent=5 // pred_check
      %p1722 = pneg %p1721
    $region50: #{kinship_forward.1} parent=5 // pred_check_branch
      %1724 = sbr.rel (%p1722) target = $region52
    $region51: #{kinship_forward.1} parent=5 // pred_region
      %s1725 = ssub.s32 %s12, 2
      // Predicated region
      $region53: #{kinship_forward.1} parent=51 // pred_check
        %p1726 = pneg %p172
      $region54: #{kinship_forward.1} parent=51 // pred_check_branch
        %1728 = sbr.rel (%p1726) target = $region56
      $region55: #{kinship_forward.1} parent=51 // pred_region
        %p1729 = scmp.lt.s32.totalorder %s18, 3
        %s1730 = scalar_select %p1729, %s18, 3
        %s1731 = scalar_lea.vmem %s6, %s1730
      $region56: #{kinship_forward.1} parent=51 // pred_fallthru
        _
    $region52: #{kinship_forward.1} parent=5 // pred_fallthru
      _
  $region6: #{kinship_forward.1} parent=0 // loop_footer
    %s16 = sadd.s32 1, %s12
  $region7: #{kinship_forward.1} parent=0 // loop_footer_branch
    %11 = sbr.rel target = $region3
  $region8: #{kinship_forward.1} parent=0 // loop_exit
    _

</llo_original>
